<compile_context>
chip_gen: v7x
topology: tpu7x:2x2x1
jax: 0.10.0
libtpu: 0.0.40
codegen_flags: <defaults>
</compile_context>

<pallas_src>
import jax
import jax.numpy as jnp
from jax import lax
from jax.experimental import pallas as pl
from jax.experimental.pallas import tpu as pltpu


PAD = 2                       # nn.Conv2d(..., padding=2) in the reference module
LANE = 128                    # lane width: pad GEMM N / output last dim to this
ACC_BYTES_CAP = 64 * 1024     # cap on register-resident accumulator (<= ~16 vregs)
MATMUL_DTYPE = jnp.float32    # set to jnp.bfloat16 on v6e/v7x (relax tolerance)


def _ceil_to(x, m):
    return -(-x // m) * m


# ---------------------------------------------------------------------------
# Weight preparation (one-time XLA glue; weight-sized)
# ---------------------------------------------------------------------------
def _weight_norm(v, g):
    """torch.nn.utils.weight_norm (dim=0): w = g * v / ||v||, per out-channel."""
    norm = jnp.sqrt(jnp.sum(v * v, axis=(1, 2, 3), keepdims=True))
    return v * (g.reshape(-1, 1, 1, 1) / norm)


def _banded_weight(w, ksize, stride, wcols, wout):
    """Fold the width-direction conv taps into dense banded GEMM operands.

    w: weight-normed (C_out, C_in, KH, KW).
    Returns (KH*stride, wcols*C_in, wout*C_out): one (K, N) matrix per
    (kh, width-phase) pair.  The kernel accumulates KH*stride lane-dense
    matmuls instead of materializing im2col patches.
    """
    cout, cin = w.shape[0], w.shape[1]
    bands = []
    for kh in range(ksize):
        for rw in range(stride):
            b4 = jnp.zeros((wcols, cin, wout, cout), w.dtype)
            n_qw = (ksize - rw + stride - 1) // stride
            for qw in range(n_qw):
                kw = stride * qw + rw
                # diag[j, wo] = 1 iff j == wo + qw (input width pos j feeds output wo)
                diag = jnp.eye(wcols, wout, k=-qw, dtype=w.dtype)
                b4 = b4 + diag[:, None, :, None] * w[:, :, kh, kw].T[None, :, None, :]
            bands.append(b4.reshape(wcols * cin, wout * cout))
    return jnp.stack(bands, axis=0)


# ---------------------------------------------------------------------------
# Fused Pallas kernel: all conv+ReLU layers of one fusion group, per batch tile
# ---------------------------------------------------------------------------
def _make_group_kernel(cfg):
    s0 = cfg['stride0']
    lays = cfg['layers']
    n_lay = len(lays)
    bt = cfg['btile']
    mm_dtype = cfg['mm_dtype']

    def kernel(*refs):
        ph_ref = refs[0]                              # (s0*s0, Hph, B_TILE, Wph*C)
        wb = refs[1:1 + 2 * n_lay]                    # (banded weight, wide bias) / layer
        out_ref = refs[1 + 2 * n_lay]
        pad_refs = refs[2 + 2 * n_lay:]               # VMEM scratch between fused layers

        act = None
        for li, lay in enumerate(lays):
            ks, s = lay['ksize'], lay['stride']
            hout, kdim, npad = lay['hout'], lay['kdim'], lay['npad']
            w_ref, b_ref = wb[2 * li], wb[2 * li + 1]

            if li == 0:
                def lhs(kh, rw, qh, _h=hout, _k=kdim):
                    p = (kh % s0) * s0 + rw           # stride phase of layer-0 input
                    return ph_ref[p, qh:qh + _h, :, :].reshape(_h * bt, _k)
            else:
                # place previous activation into a zero-padded VMEM scratch
                # (the "padding=2" of the next conv, kept on-chip).  Only the
                # border strips are zeroed; the interior is overwritten below.
                prev = lays[li - 1]
                pad_ref = pad_refs[li - 1]
                hprev, wprev, cprev = prev['hout'], prev['wout'], prev['cout']
                pcols = (wprev + 2 * PAD) * cprev
                zrow = jnp.zeros((PAD, bt, pcols), jnp.float32)
                pad_ref[0:PAD, :, :] = zrow
                pad_ref[PAD + hprev:2 * PAD + hprev, :, :] = zrow
                zcol = jnp.zeros((hprev, bt, PAD * cprev), jnp.float32)
                pad_ref[PAD:PAD + hprev, :, 0:PAD * cprev] = zcol
                pad_ref[PAD:PAD + hprev, :,
                        PAD * cprev + wprev * cprev:pcols] = zcol
                pad_ref[PAD:PAD + hprev, :,
                        PAD * cprev:PAD * cprev + wprev * cprev] = (
                    act[:, :wprev * cprev].reshape(hprev, bt, wprev * cprev))

                def lhs(kh, rw, qh, _h=hout, _k=kdim, _ref=pad_ref):
                    return _ref[kh:kh + _h, :, :].reshape(_h * bt, _k)

            # conv = sum of ks*stride lane-dense matmuls on the MXU (f32 acc).
            # M = B_TILE*hout, N = lane-padded wout*cout (multiple of 128).
            acc = jnp.zeros((hout * bt, npad), jnp.float32)
            t = 0
            for kh in range(ks):
                qh = kh // s
                for rw in range(s):
                    acc = acc + jnp.dot(lhs(kh, rw, qh).astype(mm_dtype), w_ref[t],
                                        preferred_element_type=jnp.float32)
                    t += 1
            # bias + ReLU epilogue, f32 (v5e has no bf16 VPU)
            act = jnp.maximum(acc + b_ref[...], 0.0)

        last = lays[-1]
        out_ref[...] = act.reshape(last['hout'], bt, last['npad']).astype(out_ref.dtype)

    return kernel


def _conv_group(x_nhwc, group, *, mm_dtype=MATMUL_DTYPE):
    """Run one fusion group (first layer any stride, rest stride==1) in a
    single pallas_call.  x_nhwc: (N, H, W, C) -> (N, H', W', C') NHWC."""
    N, H, W, C = x_nhwc.shape
    s0 = int(group[0]['stride'])

    # --- static per-layer geometry + kernel-ready (banded, lane-padded) weights ---
    Hph = _ceil_to(H + 2 * PAD, s0) // s0
    Wph = _ceil_to(W + 2 * PAD, s0) // s0
    cfg_layers, operands = [], []
    h_in, w_in, c_in, wcols = H, W, C, Wph
    for li, lay in enumerate(group):
        ks, st, cout = int(lay['ksize']), int(lay['stride']), int(lay['cout'])
        h_out = (h_in + 2 * PAD - ks) // st + 1
        w_out = (w_in + 2 * PAD - ks) // st + 1
        ncols = w_out * cout
        npad = _ceil_to(ncols, LANE)                  # lane-dense GEMM N / output
        wband = _banded_weight(lay['w'], ks, st, wcols, w_out)   # (ks*st, wcols*cin, ncols)
        wband = jnp.pad(wband, ((0, 0), (0, 0), (0, npad - ncols))).astype(mm_dtype)
        bwide = jnp.pad(jnp.tile(lay['b'], w_out), (0, npad - ncols))
        bwide = bwide.reshape(1, npad).astype(jnp.float32)
        operands += [wband, bwide]
        cfg_layers.append(dict(ksize=ks, stride=st, hout=h_out, wout=w_out,
                               cout=cout, ncols=ncols, npad=npad,
                               kdim=wcols * c_in))
        h_in, w_in, c_in = h_out, w_out, cout
        wcols = w_out + 2 * PAD

    # padded phase rows must cover every row the kernel slices
    qh_max = (int(group[0]['ksize']) - 1) // s0
    assert qh_max + cfg_layers[0]['hout'] <= Hph, (qh_max, cfg_layers[0]['hout'], Hph)

    # --- batch tile: fold batch into the matmul M axis (multiple of 8) ---
    max_rowbytes = max(l['hout'] * l['npad'] * 4 for l in cfg_layers)
    bt_cap = max(8, (ACC_BYTES_CAP // max_rowbytes) // 8 * 8)
    B_TILE = int(min(bt_cap, 32, _ceil_to(N, 8)))
    B_pad = _ceil_to(N, B_TILE)

    # --- single fused space-to-depth: pad -> reshape -> one transpose ---
    Hpr, Wpr = Hph * s0, Wph * s0
    xp = jnp.pad(x_nhwc, ((0, B_pad - N),
                          (PAD, PAD + Hpr - (H + 2 * PAD)),
                          (PAD, PAD + Wpr - (W + 2 * PAD)),
                          (0, 0)))
    xp = xp.reshape(B_pad, Hph, s0, Wph, s0, C)
    phases = jnp.transpose(xp, (2, 4, 1, 0, 3, 5)).reshape(s0 * s0, Hph, B_pad, Wph * C)

    # --- VMEM pad scratch between fused layers (h-major, batch-minor rows) ---
    scratch = []
    for li in range(1, len(cfg_layers)):
        prev = cfg_layers[li - 1]
        scratch.append(pltpu.VMEM((prev['hout'] + 2 * PAD, B_TILE,
                                   (prev['wout'] + 2 * PAD) * prev['cout']),
                                  jnp.float32))

    last = cfg_layers[-1]
    kernel = _make_group_kernel(dict(stride0=s0, layers=cfg_layers,
                                     btile=B_TILE, mm_dtype=mm_dtype))

    in_specs = (
        [pl.BlockSpec((s0 * s0, Hph, B_TILE, Wph * C), lambda n: (0, 0, n, 0))]
        + [pl.BlockSpec(op.shape, lambda n, nd=op.ndim: (0,) * nd) for op in operands]
    )

    out = pl.pallas_call(
        kernel,
        out_shape=jax.ShapeDtypeStruct((last['hout'], B_pad, last['npad']), jnp.float32),
        grid_spec=pltpu.PrefetchScalarGridSpec(
            num_scalar_prefetch=0,
            grid=(B_pad // B_TILE,),                  # one block per batch tile
            in_specs=in_specs,
            out_specs=pl.BlockSpec((last['hout'], B_TILE, last['npad']),
                                   lambda n: (0, n, 0)),
            scratch_shapes=scratch),
        compiler_params=pltpu.CompilerParams(
            dimension_semantics=("parallel",),        # batch tiles -> v7x 2 TCs
            vmem_limit_bytes=32 * 1024 * 1024),
    )(phases, *operands)

    # strip batch / lane padding, back to NHWC
    out = out[:, :N, :last['ncols']].reshape(last['hout'], N, last['wout'], last['cout'])
    return jnp.transpose(out, (1, 0, 2, 3))


# ---------------------------------------------------------------------------
# BorderEncoder forward
# ---------------------------------------------------------------------------
def border_encoder_forward(x_nchw, params, layers):
    # border subsampling of the last (width) axis
    x = x_nchw[:, :, :, ::params['border_scale']]
    # module boundary: NCHW -> NHWC exactly once (no per-layer transposes)
    x = jnp.transpose(x, (0, 2, 3, 1))

    prepped = []
    for (v, g, b, ksize, stride) in layers:
        w = _weight_norm(v, g)                        # (C_out, C_in, K, K)
        prepped.append(dict(w=w, b=b, ksize=int(ksize), stride=int(stride),
                            cout=int(w.shape[0])))

    # Greedy fusion: a group = one leading layer (any stride) + following
    # stride-1 layers, all in a single pallas_call with VMEM-resident
    # intermediate activations.
    i = 0
    while i < len(prepped):
        j = i + 1
        while j < len(prepped) and prepped[j]['stride'] == 1:
            j += 1
        x = _conv_group(x, prepped[i:j])
        i = j

    # back to NCHW at the module boundary (PyTorch layout)
    return jnp.transpose(x, (0, 3, 1, 2))


# Pure-JAX reference (for correctness check only)
def _reference_forward(x, params, layers):
    x = x[:, :, :, ::params['border_scale']]
    for (v, g, b, ksize, stride) in layers:
        w = _weight_norm(v, g)
        y = lax.conv_general_dilated(
            x, w, (stride, stride), ((PAD, PAD), (PAD, PAD)),
            dimension_numbers=('NCHW', 'OIHW', 'NCHW'))
        x = jnp.maximum(y + b.reshape(1, -1, 1, 1), 0.0)
    return x


if __name__ == "__main__":
    # Synthetic BorderEncoder hyper-params (module's __init__ semantics):
    #   in_channels = data_size - 1, padding = 2, square kernels.
    params = dict(data_size=5, nfilter=[8, 16], shape=[5, 3],
                  stride=[2, 1], border_scale=2)

    key = jax.random.PRNGKey(0)
    n_layers = len(params['nfilter'])
    keys = jax.random.split(key, 1 + 3 * n_layers)

    x = jax.random.normal(keys[0], (2, 4, 16, 16), dtype=jnp.float32)

    layers = []
    c_in = params['data_size'] - 1
    ki = 1
    for nf, ks, st in zip(params['nfilter'], params['shape'], params['stride']):
        v = jax.random.normal(keys[ki], (int(nf), c_in, ks, ks), jnp.float32) * 0.1
        g = jnp.abs(jax.random.normal(keys[ki + 1], (int(nf),), jnp.float32)) + 0.5
        b = jax.random.normal(keys[ki + 2], (int(nf),), jnp.float32) * 0.01
        layers.append((v, g, b, ks, st))
        c_in = int(nf)
        ki += 3

    out = border_encoder_forward(x, params, layers)
    out = jax.block_until_ready(out)

    ref = _reference_forward(x, params, layers)
    assert out.shape == ref.shape, (out.shape, ref.shape)
    err = float(jnp.max(jnp.abs(out - ref)))
    # MATMUL_DTYPE is f32 by default; relax tolerance if flipped to bf16.
    assert jnp.allclose(out, ref, atol=1e-4, rtol=1e-4), err

    print("KERNEL_OK")
</pallas_src>

<mosaic_0001>
module attributes {stable_mosaic.version = 11 : i64} {
  func.func @kernel(%arg0: i32, %arg1: memref<4x10x8x24xf32, #tpu.memory_space<vmem>>, %arg2: memref<10x24x128xf32, #tpu.memory_space<vmem>>, %arg3: memref<1x128xf32, #tpu.memory_space<vmem>>, %arg4: memref<3x64x128xf32, #tpu.memory_space<vmem>>, %arg5: memref<1x128xf32, #tpu.memory_space<vmem>>, %arg6: memref<10x8x128xf32, #tpu.memory_space<vmem>>, %arg7: memref<12x8x64xf32, #tpu.memory_space<vmem>>) attributes {dimension_semantics = [#tpu.dimension_semantics<parallel>], iteration_bounds = array<i64: 1>, scalar_prefetch = 0 : i64, scratch_operands = 1 : i64, tpu.core_type = #tpu.core_type<tc>, window_params = [{transform_indices = @transform_0, window_bounds = array<i64: 4, 10, 8, 24>}, {pipeline_mode = #tpu.pipeline_mode<synchronous>, transform_indices = @transform_1, window_bounds = array<i64: 10, 24, 128>}, {pipeline_mode = #tpu.pipeline_mode<synchronous>, transform_indices = @transform_2, window_bounds = array<i64: 1, 128>}, {pipeline_mode = #tpu.pipeline_mode<synchronous>, transform_indices = @transform_3, window_bounds = array<i64: 3, 64, 128>}, {pipeline_mode = #tpu.pipeline_mode<synchronous>, transform_indices = @transform_4, window_bounds = array<i64: 1, 128>}, {transform_indices = @transform_5, window_bounds = array<i64: 10, 8, 128>}]} {
    %cst = arith.constant 0.000000e+00 : f32
    %0 = vector.broadcast %cst : f32 to vector<64x128xf32>
    %c0 = arith.constant 0 : index
    %c0_0 = arith.constant 0 : index
    %c0_1 = arith.constant 0 : index
    %c0_2 = arith.constant 0 : index
    %1 = vector.load %arg1[%c0, %c0_0, %c0_1, %c0_2] : memref<4x10x8x24xf32, #tpu.memory_space<vmem>>, vector<1x8x8x24xf32>
    %2 = vector.shape_cast %1 : vector<1x8x8x24xf32> to vector<8x8x24xf32>
    %3 = vector.shape_cast %2 : vector<8x8x24xf32> to vector<64x24xf32>
    %c0_3 = arith.constant 0 : index
    %c0_4 = arith.constant 0 : index
    %c0_5 = arith.constant 0 : index
    %4 = vector.load %arg2[%c0_3, %c0_4, %c0_5] : memref<10x24x128xf32, #tpu.memory_space<vmem>>, vector<1x24x128xf32>
    %5 = vector.shape_cast %4 : vector<1x24x128xf32> to vector<24x128xf32>
    %cst_6 = arith.constant dense<0.000000e+00> : vector<64x128xf32>
    %6 = tpu.matmul %3, %5, %cst_6 {dimension_numbers = #tpu.dot_dimension_numbers<[1], [0], [0], [1], [0, 0, 1, 1], [], []>} : vector<64x24xf32>, vector<24x128xf32>, vector<64x128xf32> -> vector<64x128xf32>
    %7 = arith.addf %0, %6 : vector<64x128xf32>
    %c1 = arith.constant 1 : index
    %c0_7 = arith.constant 0 : index
    %c0_8 = arith.constant 0 : index
    %c0_9 = arith.constant 0 : index
    %8 = vector.load %arg1[%c1, %c0_7, %c0_8, %c0_9] : memref<4x10x8x24xf32, #tpu.memory_space<vmem>>, vector<1x8x8x24xf32>
    %9 = vector.shape_cast %8 : vector<1x8x8x24xf32> to vector<8x8x24xf32>
    %10 = vector.shape_cast %9 : vector<8x8x24xf32> to vector<64x24xf32>
    %c1_10 = arith.constant 1 : index
    %c0_11 = arith.constant 0 : index
    %c0_12 = arith.constant 0 : index
    %11 = vector.load %arg2[%c1_10, %c0_11, %c0_12] : memref<10x24x128xf32, #tpu.memory_space<vmem>>, vector<1x24x128xf32>
    %12 = vector.shape_cast %11 : vector<1x24x128xf32> to vector<24x128xf32>
    %cst_13 = arith.constant dense<0.000000e+00> : vector<64x128xf32>
    %13 = tpu.matmul %10, %12, %cst_13 {dimension_numbers = #tpu.dot_dimension_numbers<[1], [0], [0], [1], [0, 0, 1, 1], [], []>} : vector<64x24xf32>, vector<24x128xf32>, vector<64x128xf32> -> vector<64x128xf32>
    %14 = arith.addf %7, %13 : vector<64x128xf32>
    %c2 = arith.constant 2 : index
    %c0_14 = arith.constant 0 : index
    %c0_15 = arith.constant 0 : index
    %c0_16 = arith.constant 0 : index
    %15 = vector.load %arg1[%c2, %c0_14, %c0_15, %c0_16] : memref<4x10x8x24xf32, #tpu.memory_space<vmem>>, vector<1x8x8x24xf32>
    %16 = vector.shape_cast %15 : vector<1x8x8x24xf32> to vector<8x8x24xf32>
    %17 = vector.shape_cast %16 : vector<8x8x24xf32> to vector<64x24xf32>
    %c2_17 = arith.constant 2 : index
    %c0_18 = arith.constant 0 : index
    %c0_19 = arith.constant 0 : index
    %18 = vector.load %arg2[%c2_17, %c0_18, %c0_19] : memref<10x24x128xf32, #tpu.memory_space<vmem>>, vector<1x24x128xf32>
    %19 = vector.shape_cast %18 : vector<1x24x128xf32> to vector<24x128xf32>
    %cst_20 = arith.constant dense<0.000000e+00> : vector<64x128xf32>
    %20 = tpu.matmul %17, %19, %cst_20 {dimension_numbers = #tpu.dot_dimension_numbers<[1], [0], [0], [1], [0, 0, 1, 1], [], []>} : vector<64x24xf32>, vector<24x128xf32>, vector<64x128xf32> -> vector<64x128xf32>
    %21 = arith.addf %14, %20 : vector<64x128xf32>
    %c3 = arith.constant 3 : index
    %c0_21 = arith.constant 0 : index
    %c0_22 = arith.constant 0 : index
    %c0_23 = arith.constant 0 : index
    %22 = vector.load %arg1[%c3, %c0_21, %c0_22, %c0_23] : memref<4x10x8x24xf32, #tpu.memory_space<vmem>>, vector<1x8x8x24xf32>
    %23 = vector.shape_cast %22 : vector<1x8x8x24xf32> to vector<8x8x24xf32>
    %24 = vector.shape_cast %23 : vector<8x8x24xf32> to vector<64x24xf32>
    %c3_24 = arith.constant 3 : index
    %c0_25 = arith.constant 0 : index
    %c0_26 = arith.constant 0 : index
    %25 = vector.load %arg2[%c3_24, %c0_25, %c0_26] : memref<10x24x128xf32, #tpu.memory_space<vmem>>, vector<1x24x128xf32>
    %26 = vector.shape_cast %25 : vector<1x24x128xf32> to vector<24x128xf32>
    %cst_27 = arith.constant dense<0.000000e+00> : vector<64x128xf32>
    %27 = tpu.matmul %24, %26, %cst_27 {dimension_numbers = #tpu.dot_dimension_numbers<[1], [0], [0], [1], [0, 0, 1, 1], [], []>} : vector<64x24xf32>, vector<24x128xf32>, vector<64x128xf32> -> vector<64x128xf32>
    %28 = arith.addf %21, %27 : vector<64x128xf32>
    %c0_28 = arith.constant 0 : index
    %c1_29 = arith.constant 1 : index
    %c0_30 = arith.constant 0 : index
    %c0_31 = arith.constant 0 : index
    %29 = vector.load %arg1[%c0_28, %c1_29, %c0_30, %c0_31] : memref<4x10x8x24xf32, #tpu.memory_space<vmem>>, vector<1x8x8x24xf32>
    %30 = vector.shape_cast %29 : vector<1x8x8x24xf32> to vector<8x8x24xf32>
    %31 = vector.shape_cast %30 : vector<8x8x24xf32> to vector<64x24xf32>
    %c4 = arith.constant 4 : index
    %c0_32 = arith.constant 0 : index
    %c0_33 = arith.constant 0 : index
    %32 = vector.load %arg2[%c4, %c0_32, %c0_33] : memref<10x24x128xf32, #tpu.memory_space<vmem>>, vector<1x24x128xf32>
    %33 = vector.shape_cast %32 : vector<1x24x128xf32> to vector<24x128xf32>
    %cst_34 = arith.constant dense<0.000000e+00> : vector<64x128xf32>
    %34 = tpu.matmul %31, %33, %cst_34 {dimension_numbers = #tpu.dot_dimension_numbers<[1], [0], [0], [1], [0, 0, 1, 1], [], []>} : vector<64x24xf32>, vector<24x128xf32>, vector<64x128xf32> -> vector<64x128xf32>
    %35 = arith.addf %28, %34 : vector<64x128xf32>
    %c1_35 = arith.constant 1 : index
    %c1_36 = arith.constant 1 : index
    %c0_37 = arith.constant 0 : index
    %c0_38 = arith.constant 0 : index
    %36 = vector.load %arg1[%c1_35, %c1_36, %c0_37, %c0_38] : memref<4x10x8x24xf32, #tpu.memory_space<vmem>>, vector<1x8x8x24xf32>
    %37 = vector.shape_cast %36 : vector<1x8x8x24xf32> to vector<8x8x24xf32>
    %38 = vector.shape_cast %37 : vector<8x8x24xf32> to vector<64x24xf32>
    %c5 = arith.constant 5 : index
    %c0_39 = arith.constant 0 : index
    %c0_40 = arith.constant 0 : index
    %39 = vector.load %arg2[%c5, %c0_39, %c0_40] : memref<10x24x128xf32, #tpu.memory_space<vmem>>, vector<1x24x128xf32>
    %40 = vector.shape_cast %39 : vector<1x24x128xf32> to vector<24x128xf32>
    %cst_41 = arith.constant dense<0.000000e+00> : vector<64x128xf32>
    %41 = tpu.matmul %38, %40, %cst_41 {dimension_numbers = #tpu.dot_dimension_numbers<[1], [0], [0], [1], [0, 0, 1, 1], [], []>} : vector<64x24xf32>, vector<24x128xf32>, vector<64x128xf32> -> vector<64x128xf32>
    %42 = arith.addf %35, %41 : vector<64x128xf32>
    %c2_42 = arith.constant 2 : index
    %c1_43 = arith.constant 1 : index
    %c0_44 = arith.constant 0 : index
    %c0_45 = arith.constant 0 : index
    %43 = vector.load %arg1[%c2_42, %c1_43, %c0_44, %c0_45] : memref<4x10x8x24xf32, #tpu.memory_space<vmem>>, vector<1x8x8x24xf32>
    %44 = vector.shape_cast %43 : vector<1x8x8x24xf32> to vector<8x8x24xf32>
    %45 = vector.shape_cast %44 : vector<8x8x24xf32> to vector<64x24xf32>
    %c6 = arith.constant 6 : index
    %c0_46 = arith.constant 0 : index
    %c0_47 = arith.constant 0 : index
    %46 = vector.load %arg2[%c6, %c0_46, %c0_47] : memref<10x24x128xf32, #tpu.memory_space<vmem>>, vector<1x24x128xf32>
    %47 = vector.shape_cast %46 : vector<1x24x128xf32> to vector<24x128xf32>
    %cst_48 = arith.constant dense<0.000000e+00> : vector<64x128xf32>
    %48 = tpu.matmul %45, %47, %cst_48 {dimension_numbers = #tpu.dot_dimension_numbers<[1], [0], [0], [1], [0, 0, 1, 1], [], []>} : vector<64x24xf32>, vector<24x128xf32>, vector<64x128xf32> -> vector<64x128xf32>
    %49 = arith.addf %42, %48 : vector<64x128xf32>
    %c3_49 = arith.constant 3 : index
    %c1_50 = arith.constant 1 : index
    %c0_51 = arith.constant 0 : index
    %c0_52 = arith.constant 0 : index
    %50 = vector.load %arg1[%c3_49, %c1_50, %c0_51, %c0_52] : memref<4x10x8x24xf32, #tpu.memory_space<vmem>>, vector<1x8x8x24xf32>
    %51 = vector.shape_cast %50 : vector<1x8x8x24xf32> to vector<8x8x24xf32>
    %52 = vector.shape_cast %51 : vector<8x8x24xf32> to vector<64x24xf32>
    %c7 = arith.constant 7 : index
    %c0_53 = arith.constant 0 : index
    %c0_54 = arith.constant 0 : index
    %53 = vector.load %arg2[%c7, %c0_53, %c0_54] : memref<10x24x128xf32, #tpu.memory_space<vmem>>, vector<1x24x128xf32>
    %54 = vector.shape_cast %53 : vector<1x24x128xf32> to vector<24x128xf32>
    %cst_55 = arith.constant dense<0.000000e+00> : vector<64x128xf32>
    %55 = tpu.matmul %52, %54, %cst_55 {dimension_numbers = #tpu.dot_dimension_numbers<[1], [0], [0], [1], [0, 0, 1, 1], [], []>} : vector<64x24xf32>, vector<24x128xf32>, vector<64x128xf32> -> vector<64x128xf32>
    %56 = arith.addf %49, %55 : vector<64x128xf32>
    %c0_56 = arith.constant 0 : index
    %c2_57 = arith.constant 2 : index
    %c0_58 = arith.constant 0 : index
    %c0_59 = arith.constant 0 : index
    %57 = vector.load %arg1[%c0_56, %c2_57, %c0_58, %c0_59] : memref<4x10x8x24xf32, #tpu.memory_space<vmem>>, vector<1x8x8x24xf32>
    %58 = vector.shape_cast %57 : vector<1x8x8x24xf32> to vector<8x8x24xf32>
    %59 = vector.shape_cast %58 : vector<8x8x24xf32> to vector<64x24xf32>
    %c8 = arith.constant 8 : index
    %c0_60 = arith.constant 0 : index
    %c0_61 = arith.constant 0 : index
    %60 = vector.load %arg2[%c8, %c0_60, %c0_61] : memref<10x24x128xf32, #tpu.memory_space<vmem>>, vector<1x24x128xf32>
    %61 = vector.shape_cast %60 : vector<1x24x128xf32> to vector<24x128xf32>
    %cst_62 = arith.constant dense<0.000000e+00> : vector<64x128xf32>
    %62 = tpu.matmul %59, %61, %cst_62 {dimension_numbers = #tpu.dot_dimension_numbers<[1], [0], [0], [1], [0, 0, 1, 1], [], []>} : vector<64x24xf32>, vector<24x128xf32>, vector<64x128xf32> -> vector<64x128xf32>
    %63 = arith.addf %56, %62 : vector<64x128xf32>
    %c1_63 = arith.constant 1 : index
    %c2_64 = arith.constant 2 : index
    %c0_65 = arith.constant 0 : index
    %c0_66 = arith.constant 0 : index
    %64 = vector.load %arg1[%c1_63, %c2_64, %c0_65, %c0_66] : memref<4x10x8x24xf32, #tpu.memory_space<vmem>>, vector<1x8x8x24xf32>
    %65 = vector.shape_cast %64 : vector<1x8x8x24xf32> to vector<8x8x24xf32>
    %66 = vector.shape_cast %65 : vector<8x8x24xf32> to vector<64x24xf32>
    %c9 = arith.constant 9 : index
    %c0_67 = arith.constant 0 : index
    %c0_68 = arith.constant 0 : index
    %67 = vector.load %arg2[%c9, %c0_67, %c0_68] : memref<10x24x128xf32, #tpu.memory_space<vmem>>, vector<1x24x128xf32>
    %68 = vector.shape_cast %67 : vector<1x24x128xf32> to vector<24x128xf32>
    %cst_69 = arith.constant dense<0.000000e+00> : vector<64x128xf32>
    %69 = tpu.matmul %66, %68, %cst_69 {dimension_numbers = #tpu.dot_dimension_numbers<[1], [0], [0], [1], [0, 0, 1, 1], [], []>} : vector<64x24xf32>, vector<24x128xf32>, vector<64x128xf32> -> vector<64x128xf32>
    %70 = arith.addf %63, %69 : vector<64x128xf32>
    %c0_70 = arith.constant 0 : index
    %c0_71 = arith.constant 0 : index
    %71 = vector.load %arg3[%c0_70, %c0_71] : memref<1x128xf32, #tpu.memory_space<vmem>>, vector<1x128xf32>
    %72 = vector.broadcast %71 : vector<1x128xf32> to vector<64x128xf32>
    %73 = arith.addf %70, %72 : vector<64x128xf32>
    %cst_72 = arith.constant 0.000000e+00 : f32
    %74 = vector.broadcast %cst_72 : f32 to vector<64x128xf32>
    %75 = arith.maximumf %73, %74 : vector<64x128xf32>
    %cst_73 = arith.constant 0.000000e+00 : f32
    %76 = vector.broadcast %cst_73 : f32 to vector<2x8x64xf32>
    %c0_74 = arith.constant 0 : index
    %c0_75 = arith.constant 0 : index
    %c0_76 = arith.constant 0 : index
    %77 = vector.load %arg7[%c0_74, %c0_75, %c0_76] : memref<12x8x64xf32, #tpu.memory_space<vmem>>, vector<2x8x64xf32>
    tpu.vector_store %arg7[%c0_74, %c0_75, %c0_76], %76 {strides = array<i32>} : memref<12x8x64xf32, #tpu.memory_space<vmem>>, vector<2x8x64xf32>,
    %c10 = arith.constant 10 : index
    %c0_77 = arith.constant 0 : index
    %c0_78 = arith.constant 0 : index
    %78 = vector.load %arg7[%c10, %c0_77, %c0_78] : memref<12x8x64xf32, #tpu.memory_space<vmem>>, vector<2x8x64xf32>
    tpu.vector_store %arg7[%c10, %c0_77, %c0_78], %76 {strides = array<i32>} : memref<12x8x64xf32, #tpu.memory_space<vmem>>, vector<2x8x64xf32>,
    %cst_79 = arith.constant 0.000000e+00 : f32
    %79 = vector.broadcast %cst_79 : f32 to vector<8x8x16xf32>
    %c2_80 = arith.constant 2 : index
    %c0_81 = arith.constant 0 : index
    %c0_82 = arith.constant 0 : index
    %80 = vector.load %arg7[%c2_80, %c0_81, %c0_82] : memref<12x8x64xf32, #tpu.memory_space<vmem>>, vector<8x8x16xf32>
    tpu.vector_store %arg7[%c2_80, %c0_81, %c0_82], %79 {strides = array<i32>} : memref<12x8x64xf32, #tpu.memory_space<vmem>>, vector<8x8x16xf32>,
    %c2_83 = arith.constant 2 : index
    %c0_84 = arith.constant 0 : index
    %c48 = arith.constant 48 : index
    %81 = vector.load %arg7[%c2_83, %c0_84, %c48] : memref<12x8x64xf32, #tpu.memory_space<vmem>>, vector<8x8x16xf32>
    tpu.vector_store %arg7[%c2_83, %c0_84, %c48], %79 {strides = array<i32>} : memref<12x8x64xf32, #tpu.memory_space<vmem>>, vector<8x8x16xf32>,
    %82 = vector.extract_strided_slice %75 {offsets = [0, 0], sizes = [64, 32], strides = [1, 1]} : vector<64x128xf32> to vector<64x32xf32>
    %83 = vector.shape_cast %82 : vector<64x32xf32> to vector<8x8x32xf32>
    %c2_85 = arith.constant 2 : index
    %c0_86 = arith.constant 0 : index
    %c16 = arith.constant 16 : index
    %84 = vector.load %arg7[%c2_85, %c0_86, %c16] : memref<12x8x64xf32, #tpu.memory_space<vmem>>, vector<8x8x32xf32>
    tpu.vector_store %arg7[%c2_85, %c0_86, %c16], %83 {strides = array<i32>} : memref<12x8x64xf32, #tpu.memory_space<vmem>>, vector<8x8x32xf32>,
    %cst_87 = arith.constant 0.000000e+00 : f32
    %85 = vector.broadcast %cst_87 : f32 to vector<80x128xf32>
    %c0_88 = arith.constant 0 : index
    %c0_89 = arith.constant 0 : index
    %c0_90 = arith.constant 0 : index
    %86 = vector.load %arg7[%c0_88, %c0_89, %c0_90] : memref<12x8x64xf32, #tpu.memory_space<vmem>>, vector<10x8x64xf32>
    %87 = vector.shape_cast %86 : vector<10x8x64xf32> to vector<80x64xf32>
    %c0_91 = arith.constant 0 : index
    %c0_92 = arith.constant 0 : index
    %c0_93 = arith.constant 0 : index
    %88 = vector.load %arg4[%c0_91, %c0_92, %c0_93] : memref<3x64x128xf32, #tpu.memory_space<vmem>>, vector<1x64x128xf32>
    %89 = vector.shape_cast %88 : vector<1x64x128xf32> to vector<64x128xf32>
    %cst_94 = arith.constant dense<0.000000e+00> : vector<80x128xf32>
    %90 = tpu.matmul %87, %89, %cst_94 {dimension_numbers = #tpu.dot_dimension_numbers<[1], [0], [0], [1], [0, 0, 1, 1], [], []>} : vector<80x64xf32>, vector<64x128xf32>, vector<80x128xf32> -> vector<80x128xf32>
    %91 = arith.addf %85, %90 : vector<80x128xf32>
    %c1_95 = arith.constant 1 : index
    %c0_96 = arith.constant 0 : index
    %c0_97 = arith.constant 0 : index
    %92 = vector.load %arg7[%c1_95, %c0_96, %c0_97] : memref<12x8x64xf32, #tpu.memory_space<vmem>>, vector<10x8x64xf32>
    %93 = vector.shape_cast %92 : vector<10x8x64xf32> to vector<80x64xf32>
    %c1_98 = arith.constant 1 : index
    %c0_99 = arith.constant 0 : index
    %c0_100 = arith.constant 0 : index
    %94 = vector.load %arg4[%c1_98, %c0_99, %c0_100] : memref<3x64x128xf32, #tpu.memory_space<vmem>>, vector<1x64x128xf32>
    %95 = vector.shape_cast %94 : vector<1x64x128xf32> to vector<64x128xf32>
    %cst_101 = arith.constant dense<0.000000e+00> : vector<80x128xf32>
    %96 = tpu.matmul %93, %95, %cst_101 {dimension_numbers = #tpu.dot_dimension_numbers<[1], [0], [0], [1], [0, 0, 1, 1], [], []>} : vector<80x64xf32>, vector<64x128xf32>, vector<80x128xf32> -> vector<80x128xf32>
    %97 = arith.addf %91, %96 : vector<80x128xf32>
    %c2_102 = arith.constant 2 : index
    %c0_103 = arith.constant 0 : index
    %c0_104 = arith.constant 0 : index
    %98 = vector.load %arg7[%c2_102, %c0_103, %c0_104] : memref<12x8x64xf32, #tpu.memory_space<vmem>>, vector<10x8x64xf32>
    %99 = vector.shape_cast %98 : vector<10x8x64xf32> to vector<80x64xf32>
    %c2_105 = arith.constant 2 : index
    %c0_106 = arith.constant 0 : index
    %c0_107 = arith.constant 0 : index
    %100 = vector.load %arg4[%c2_105, %c0_106, %c0_107] : memref<3x64x128xf32, #tpu.memory_space<vmem>>, vector<1x64x128xf32>
    %101 = vector.shape_cast %100 : vector<1x64x128xf32> to vector<64x128xf32>
    %cst_108 = arith.constant dense<0.000000e+00> : vector<80x128xf32>
    %102 = tpu.matmul %99, %101, %cst_108 {dimension_numbers = #tpu.dot_dimension_numbers<[1], [0], [0], [1], [0, 0, 1, 1], [], []>} : vector<80x64xf32>, vector<64x128xf32>, vector<80x128xf32> -> vector<80x128xf32>
    %103 = arith.addf %97, %102 : vector<80x128xf32>
    %c0_109 = arith.constant 0 : index
    %c0_110 = arith.constant 0 : index
    %104 = vector.load %arg5[%c0_109, %c0_110] : memref<1x128xf32, #tpu.memory_space<vmem>>, vector<1x128xf32>
    %105 = vector.broadcast %104 : vector<1x128xf32> to vector<80x128xf32>
    %106 = arith.addf %103, %105 : vector<80x128xf32>
    %cst_111 = arith.constant 0.000000e+00 : f32
    %107 = vector.broadcast %cst_111 : f32 to vector<80x128xf32>
    %108 = arith.maximumf %106, %107 : vector<80x128xf32>
    %109 = vector.shape_cast %108 : vector<80x128xf32> to vector<10x8x128xf32>
    %c0_112 = arith.constant 0 : index
    %c0_113 = arith.constant 0 : index
    %c0_114 = arith.constant 0 : index
    %110 = vector.load %arg6[%c0_112, %c0_113, %c0_114] : memref<10x8x128xf32, #tpu.memory_space<vmem>>, vector<10x8x128xf32>
    tpu.vector_store %arg6[%c0_112, %c0_113, %c0_114], %109 {strides = array<i32>} : memref<10x8x128xf32, #tpu.memory_space<vmem>>, vector<10x8x128xf32>,
    return
  }
  func.func @transform_0(%arg0: i32) -> (i32, i32, i32, i32) {
    %c0_i32 = arith.constant 0 : i32
    %c0_i32_0 = arith.constant 0 : i32
    %c0_i32_1 = arith.constant 0 : i32
    %c0_i32_2 = arith.constant 0 : i32
    return %c0_i32, %c0_i32_0, %arg0, %c0_i32_1 : i32, i32, i32, i32
  }
  func.func @transform_1(%arg0: i32) -> (i32, i32, i32) {
    %c0_i32 = arith.constant 0 : i32
    %c0_i32_0 = arith.constant 0 : i32
    %c0_i32_1 = arith.constant 0 : i32
    %c0_i32_2 = arith.constant 0 : i32
    return %c0_i32, %c0_i32_0, %c0_i32_1 : i32, i32, i32
  }
  func.func @transform_2(%arg0: i32) -> (i32, i32) {
    %c0_i32 = arith.constant 0 : i32
    %c0_i32_0 = arith.constant 0 : i32
    %c0_i32_1 = arith.constant 0 : i32
    return %c0_i32, %c0_i32_0 : i32, i32
  }
  func.func @transform_3(%arg0: i32) -> (i32, i32, i32) {
    %c0_i32 = arith.constant 0 : i32
    %c0_i32_0 = arith.constant 0 : i32
    %c0_i32_1 = arith.constant 0 : i32
    %c0_i32_2 = arith.constant 0 : i32
    return %c0_i32, %c0_i32_0, %c0_i32_1 : i32, i32, i32
  }
  func.func @transform_4(%arg0: i32) -> (i32, i32) {
    %c0_i32 = arith.constant 0 : i32
    %c0_i32_0 = arith.constant 0 : i32
    %c0_i32_1 = arith.constant 0 : i32
    return %c0_i32, %c0_i32_0 : i32, i32
  }
  func.func @transform_5(%arg0: i32) -> (i32, i32, i32) {
    %c0_i32 = arith.constant 0 : i32
    %c0_i32_0 = arith.constant 0 : i32
    %c0_i32_1 = arith.constant 0 : i32
    return %c0_i32, %arg0, %c0_i32_0 : i32, i32, i32
  }
}

</mosaic_0001>

<llo_original>
// kernel: tpu_custom_call.1
$region0: #{tpu_custom_call.1}
  #allocation0 [shape = 'u32[]', space=smem, size = 0x4, offset = 0x4, fixed_abs, tag = 'smem constant byte address 0x4 - core index']
  #allocation1 [shape = 'u32[144,128]{1,0:T(1,128)}', space=vmem, size = 0x12000, scoped, tag = 'internal scratch']
  #allocation2 [shape = 'f32[12,8,64]{2,1,0:T(8,128)}', space=vmem, size = 0xc000, scoped, tag = 'scratch operand']
  %s0 = inlined_call_operand.hbm [shape: f32[4,10,8,24], index: 0, kind: input, shape index: {}]
  %s1 = inlined_call_operand.hbm [shape: f32[10,24,128], index: 1, kind: input, shape index: {}]
  %s2 = inlined_call_operand.vmem [shape: f32[1,128], index: 2, kind: input, shape index: {}]
  %s3 = inlined_call_operand.hbm [shape: f32[3,64,128], index: 3, kind: input, shape index: {}]
  %s4 = inlined_call_operand.vmem [shape: f32[1,128], index: 4, kind: input, shape index: {}]
  %s5 = inlined_call_operand.hbm [shape: f32[10,8,128], index: 5, kind: output, shape index: {}]
  %s6 = sld [smem:[#allocation0]]
  $region42: #{tpu_custom_call.1} parent=0
    _
  %s8 = ssub.s32 1, %s6
  %s9 = scalar_select 0, %s8, %s6
  $region1: #{tpu_custom_call.1} parent=0
    #allocation3 [shape = 'u8[163840]{0}', space=vmem, size = 0x28000, scoped, tag = 'input window, operand 0, single buffered']
    #allocation4 [shape = 's32[1]{0}', space=sflag, size = 0x4, scoped, tag = 'scoped memory for tpu_custom_call.1']
    #allocation5 [shape = 's32[1]{0}', space=sflag, size = 0x4, scoped, tag = 'scoped memory for tpu_custom_call.1']
    #allocation6 [shape = 'u8[122880]{0}', space=vmem, size = 0x1e000, scoped, tag = 'input window, operand 1, single buffered']
    #allocation7 [shape = 's32[1]{0}', space=sflag, size = 0x4, scoped, tag = 'scoped memory for tpu_custom_call.1']
    #allocation8 [shape = 'u8[98304]{0}', space=vmem, size = 0x18000, scoped, tag = 'input window, operand 3, single buffered']
    #allocation9 [shape = 'u8[40960]{0}', space=vmem, size = 0xa000, scoped, tag = 'output window, operand 0, single buffered']
    %10 = vsyncpa [#allocation4], 0
    %11 = vsyncpa [#allocation7], 0
    %12 = vsyncpa [#allocation5], 0
    // Predicated region
    $region2: #{tpu_custom_call.1} parent=1 // pred_check
      _
    $region3: #{tpu_custom_call.1} parent=1 // pred_check_branch
      %14 = sbr.rel (0) target = $region5
    $region4: #{tpu_custom_call.1} parent=1 // pred_region
      %s16 = ssub.s32 5120, 5120
      %17 = vsyncadd [#allocation4], %s16
      %s18 = sshll.u32 [#allocation3], 4
      %s19 = int_to_ptr.vmem [resolvable:$true] %s18
      %24 = dma.hbm_to_vmem [thread:$0]  %s0, 5120, %s19, [#allocation4], 128, 128, 8
    $region5: #{tpu_custom_call.1} parent=1 // pred_fallthru
      _
    // Predicated region
    $region6: #{tpu_custom_call.1} parent=1 // pred_check
      _
    $region7: #{tpu_custom_call.1} parent=1 // pred_check_branch
      %26 = sbr.rel (0) target = $region9
    $region8: #{tpu_custom_call.1} parent=1 // pred_region
      %s28 = ssub.s32 3840, 3840
      %29 = vsyncadd [#allocation7], %s28
      %s30 = sshll.u32 [#allocation6], 4
      %s31 = int_to_ptr.vmem [resolvable:$true] %s30
      %36 = dma.hbm_to_vmem [thread:$0]  %s1, 3840, %s31, [#allocation7], 128, 128, 8
    $region9: #{tpu_custom_call.1} parent=1 // pred_fallthru
      _
    // Predicated region
    $region10: #{tpu_custom_call.1} parent=1 // pred_check
      _
    $region11: #{tpu_custom_call.1} parent=1 // pred_check_branch
      %38 = sbr.rel (0) target = $region13
    $region12: #{tpu_custom_call.1} parent=1 // pred_region
      _
    $region13: #{tpu_custom_call.1} parent=1 // pred_fallthru
      _
    // Predicated region
    $region14: #{tpu_custom_call.1} parent=1 // pred_check
      _
    $region15: #{tpu_custom_call.1} parent=1 // pred_check_branch
      %40 = sbr.rel (0) target = $region17
    $region16: #{tpu_custom_call.1} parent=1 // pred_region
      %s42 = ssub.s32 3072, 3072
      %43 = vsyncadd [#allocation7], %s42
      %s44 = sshll.u32 [#allocation8], 4
      %s45 = int_to_ptr.vmem [resolvable:$true] %s44
      %50 = dma.hbm_to_vmem [thread:$0]  %s3, 3072, %s45, [#allocation7], 128, 128, 8
    $region17: #{tpu_custom_call.1} parent=1 // pred_fallthru
      _
    // Predicated region
    $region18: #{tpu_custom_call.1} parent=1 // pred_check
      _
    $region19: #{tpu_custom_call.1} parent=1 // pred_check_branch
      %52 = sbr.rel (0) target = $region21
    $region20: #{tpu_custom_call.1} parent=1 // pred_region
      _
    $region21: #{tpu_custom_call.1} parent=1 // pred_fallthru
      _
    // Predicated region
    $region22: #{tpu_custom_call.1} parent=1 // pred_check
      _
    $region23: #{tpu_custom_call.1} parent=1 // pred_check_branch
      %54 = sbr.rel (0) target = $region25
    $region24: #{tpu_custom_call.1} parent=1 // pred_region
      %55 = dma.done [#allocation4], 5120
    $region25: #{tpu_custom_call.1} parent=1 // pred_fallthru
      _
    // Predicated region
    $region26: #{tpu_custom_call.1} parent=1 // pred_check
      _
    $region27: #{tpu_custom_call.1} parent=1 // pred_check_branch
      %57 = sbr.rel (0) target = $region29
    $region28: #{tpu_custom_call.1} parent=1 // pred_region
      %58 = dma.done [#allocation7], 3840
    $region29: #{tpu_custom_call.1} parent=1 // pred_fallthru
      _
    // Predicated region
    $region30: #{tpu_custom_call.1} parent=1 // pred_check
      _
    $region31: #{tpu_custom_call.1} parent=1 // pred_check_branch
      %60 = sbr.rel (0) target = $region33
    $region32: #{tpu_custom_call.1} parent=1 // pred_region
      %61 = dma.done [#allocation7], 3072
    $region33: #{tpu_custom_call.1} parent=1 // pred_fallthru
      _
    %v62 = vld [vmem:[#allocation3] sm:$0xff]
    %v63 = vld [vmem:[#allocation3 + $0x8] sm:$0xff]
    %v64 = vld [vmem:[#allocation3 + $0x10] sm:$0xff]
    %v65 = vld [vmem:[#allocation3 + $0x18] sm:$0xff]
    %v66 = vld [vmem:[#allocation3 + $0x20] sm:$0xff]
    %v67 = vld [vmem:[#allocation3 + $0x28] sm:$0xff]
    %v68 = vld [vmem:[#allocation3 + $0x30] sm:$0xff]
    %v69 = vld [vmem:[#allocation3 + $0x38] sm:$0xff]
    %v70 = vld [vmem:[#allocation6] sm:$0xff]
    %v71 = vld [vmem:[#allocation6 + $0x8] sm:$0xff]
    %v72 = vld [vmem:[#allocation6 + $0x10] sm:$0xff]
    %s73 = scalar_lea.vmem [#allocation3], 80
    %v74 = vld [vmem:[%s73] sm:$0xff]
    %v75 = vld [vmem:[%s73 + $0x8] sm:$0xff]
    %v76 = vld [vmem:[%s73 + $0x10] sm:$0xff]
    %v77 = vld [vmem:[%s73 + $0x18] sm:$0xff]
    %v78 = vld [vmem:[%s73 + $0x20] sm:$0xff]
    %v79 = vld [vmem:[%s73 + $0x28] sm:$0xff]
    %v80 = vld [vmem:[%s73 + $0x30] sm:$0xff]
    %v81 = vld [vmem:[%s73 + $0x38] sm:$0xff]
    %s82 = scalar_lea.vmem [#allocation6], 24
    %v83 = vld [vmem:[%s82] sm:$0xff]
    %v84 = vld [vmem:[%s82 + $0x8] sm:$0xff]
    %v85 = vld [vmem:[%s82 + $0x10] sm:$0xff]
    %vm86 = vcmask 195584
    %v88 = vsel %vm86, %v74, 0
    %v91 = vsel %vm86, %v75, 0
    %v94 = vsel %vm86, %v76, 0
    %v97 = vsel %vm86, %v77, 0
    %v100 = vsel %vm86, %v78, 0
    %v103 = vsel %vm86, %v79, 0
    %v106 = vsel %vm86, %v80, 0
    %v109 = vsel %vm86, %v81, 0
    %111 = vmatprep.subr.mxu0 0.0
    %112 = vmatpush1.msra.mxu0 %v83
    %113 = vmatprep.subr.mxu0 0.0
    %114 = vmatpush1.msra.mxu0 %v84
    %115 = vmatprep.subr.mxu0 0.0
    %116 = vmatpush1.msra.mxu0 %v85
    %117 = vmatprep.subr.mxu0 0.0
    %118 = vmatpush1.msra.mxu0 0.0
    %119 = vmatprep.subr.mxu0 0.0
    %120 = vmatpush1.msra.mxu0 0.0
    %121 = vmatprep.subr.mxu0 0.0
    %122 = vmatpush1.msra.mxu0 0.0
    %123 = vmatprep.subr.mxu0 0.0
    %124 = vmatpush1.msra.mxu0 0.0
    %125 = vmatprep.subr.mxu0 0.0
    %126 = vmatpush1.msra.mxu0 0.0
    %127 = vmatprep.subr.mxu0 0.0
    %128 = vmatpush1.msra.mxu0 0.0
    %129 = vmatprep.subr.mxu0 0.0
    %130 = vmatpush1.msra.mxu0 0.0
    %131 = vmatprep.subr.mxu0 0.0
    %132 = vmatpush1.msra.mxu0 0.0
    %133 = vmatprep.subr.mxu0 0.0
    %134 = vmatpush1.msra.mxu0 0.0
    %135 = vmatprep.subr.mxu0 0.0
    %136 = vmatpush1.msra.mxu0 0.0
    %137 = vmatprep.subr.mxu0 0.0
    %138 = vmatpush1.msra.mxu0 0.0
    %139 = vmatprep.subr.mxu0 0.0
    %140 = vmatpush1.msra.mxu0 0.0
    %141 = vmatprep.subr.mxu0 0.0
    %142 = vmatpush1.msra.mxu0 0.0
    %143 = vmatprep.subr.mxu0 0.0
    %144 = vmatpush1.msra.mxu0 0.0
    %145 = vmatprep.subr.mxu0 0.0
    %146 = vmatpush1.msra.mxu0 0.0
    %147 = vmatprep.subr.mxu0 0.0
    %148 = vmatpush1.msra.mxu0 0.0
    %149 = vmatprep.subr.mxu0 0.0
    %150 = vmatpush1.msra.mxu0 0.0
    %151 = vmatprep.subr.mxu0 0.0
    %152 = vmatpush1.msra.mxu0 0.0
    %153 = vmatprep.subr.mxu0 0.0
    %154 = vmatpush1.msra.mxu0 0.0
    %155 = vmatprep.subr.mxu0 0.0
    %156 = vmatpush1.msra.mxu0 0.0
    %157 = vmatprep.subr.mxu0 0.0
    %158 = vmatpush1.msra.mxu0 0.0
    %159 = vmatprep.subr.mxu0 0.0
    %160 = vmatpush1.msra.mxu0 0.0
    %161 = vmatprep.subr.mxu0 0.0
    %162 = vmatpush1.msra.mxu0 0.0
    %163 = vmatprep.subr.mxu0 0.0
    %164 = vmatpush1.msra.mxu0 0.0
    %165 = vmatprep.subr.mxu0 0.0
    %166 = vmatpush1.msra.mxu0 0.0
    %167 = vmatprep.subr.mxu0 0.0
    %168 = vmatpush1.msra.mxu0 0.0
    %169 = vmatprep.subr.mxu0 0.0
    %170 = vmatpush1.msra.mxu0 0.0
    %171 = vmatprep.subr.mxu0 0.0
    %172 = vmatpush1.msra.mxu0 0.0
    %173 = vmatprep.subr.mxu0 0.0
    %174 = vmatpush1.msra.mxu0 0.0
    %175 = vmatprep.mubr.f32.mxu0 0.0
    %176 = vmatmul.mubr.f32.gmra.mrb[0].mxu0 %v88
    %v177 = vpop.f32.mrb[0].mxu0
    %v178 = vadd.f32 0.0, %v177
    %v179 = vpop.f32.mrb[0].mxu0
    %180 = vmatprep.mubr.f32.mxu0 0.0
    %181 = vmatmul.mubr.f32.gmra.mrb[0].mxu0 %v91
    %v182 = vpop.f32.mrb[0].mxu0
    %v183 = vadd.f32 0.0, %v182
    %v184 = vpop.f32.mrb[0].mxu0
    %185 = vmatprep.mubr.f32.mxu0 0.0
    %186 = vmatmul.mubr.f32.gmra.mrb[0].mxu0 %v94
    %v187 = vpop.f32.mrb[0].mxu0
    %v188 = vadd.f32 0.0, %v187
    %v189 = vpop.f32.mrb[0].mxu0
    %190 = vmatprep.mubr.f32.mxu0 0.0
    %191 = vmatmul.mubr.f32.gmra.mrb[0].mxu0 %v97
    %v192 = vpop.f32.mrb[0].mxu0
    %v193 = vadd.f32 0.0, %v192
    %v194 = vpop.f32.mrb[0].mxu0
    %195 = vmatprep.mubr.f32.mxu0 0.0
    %196 = vmatmul.mubr.f32.gmra.mrb[0].mxu0 %v100
    %v197 = vpop.f32.mrb[0].mxu0
    %v198 = vadd.f32 0.0, %v197
    %v199 = vpop.f32.mrb[0].mxu0
    %200 = vmatprep.mubr.f32.mxu0 0.0
    %201 = vmatmul.mubr.f32.gmra.mrb[0].mxu0 %v103
    %v202 = vpop.f32.mrb[0].mxu0
    %v203 = vadd.f32 0.0, %v202
    %v204 = vpop.f32.mrb[0].mxu0
    %205 = vmatprep.mubr.f32.mxu0 0.0
    %206 = vmatmul.mubr.f32.gmra.mrb[0].mxu0 %v106
    %v207 = vpop.f32.mrb[0].mxu0
    %v208 = vadd.f32 0.0, %v207
    %v209 = vpop.f32.mrb[0].mxu0
    %210 = vmatprep.mubr.f32.mxu0 0.0
    %211 = vmatmul.mubr.f32.gmra.mrb[0].mxu0 %v109
    %v212 = vpop.f32.mrb[0].mxu0
    %v213 = vadd.f32 0.0, %v212
    %v214 = vpop.f32.mrb[0].mxu0
    %215 = vdwg.mxu0
    %v217 = vsel %vm86, %v62, 0
    %v220 = vsel %vm86, %v63, 0
    %v223 = vsel %vm86, %v64, 0
    %v226 = vsel %vm86, %v65, 0
    %v229 = vsel %vm86, %v66, 0
    %v232 = vsel %vm86, %v67, 0
    %v235 = vsel %vm86, %v68, 0
    %v238 = vsel %vm86, %v69, 0
    %240 = vmatprep.subr.mxu0 0.0
    %241 = vmatpush1.msra.mxu0 %v70
    %242 = vmatprep.subr.mxu0 0.0
    %243 = vmatpush1.msra.mxu0 %v71
    %244 = vmatprep.subr.mxu0 0.0
    %245 = vmatpush1.msra.mxu0 %v72
    %246 = vmatprep.subr.mxu0 0.0
    %247 = vmatpush1.msra.mxu0 0.0
    %248 = vmatprep.subr.mxu0 0.0
    %249 = vmatpush1.msra.mxu0 0.0
    %250 = vmatprep.subr.mxu0 0.0
    %251 = vmatpush1.msra.mxu0 0.0
    %252 = vmatprep.subr.mxu0 0.0
    %253 = vmatpush1.msra.mxu0 0.0
    %254 = vmatprep.subr.mxu0 0.0
    %255 = vmatpush1.msra.mxu0 0.0
    %256 = vmatprep.subr.mxu0 0.0
    %257 = vmatpush1.msra.mxu0 0.0
    %258 = vmatprep.subr.mxu0 0.0
    %259 = vmatpush1.msra.mxu0 0.0
    %260 = vmatprep.subr.mxu0 0.0
    %261 = vmatpush1.msra.mxu0 0.0
    %262 = vmatprep.subr.mxu0 0.0
    %263 = vmatpush1.msra.mxu0 0.0
    %264 = vmatprep.subr.mxu0 0.0
    %265 = vmatpush1.msra.mxu0 0.0
    %266 = vmatprep.subr.mxu0 0.0
    %267 = vmatpush1.msra.mxu0 0.0
    %268 = vmatprep.subr.mxu0 0.0
    %269 = vmatpush1.msra.mxu0 0.0
    %270 = vmatprep.subr.mxu0 0.0
    %271 = vmatpush1.msra.mxu0 0.0
    %272 = vmatprep.subr.mxu0 0.0
    %273 = vmatpush1.msra.mxu0 0.0
    %274 = vmatprep.subr.mxu0 0.0
    %275 = vmatpush1.msra.mxu0 0.0
    %276 = vmatprep.subr.mxu0 0.0
    %277 = vmatpush1.msra.mxu0 0.0
    %278 = vmatprep.subr.mxu0 0.0
    %279 = vmatpush1.msra.mxu0 0.0
    %280 = vmatprep.subr.mxu0 0.0
    %281 = vmatpush1.msra.mxu0 0.0
    %282 = vmatprep.subr.mxu0 0.0
    %283 = vmatpush1.msra.mxu0 0.0
    %284 = vmatprep.subr.mxu0 0.0
    %285 = vmatpush1.msra.mxu0 0.0
    %286 = vmatprep.subr.mxu0 0.0
    %287 = vmatpush1.msra.mxu0 0.0
    %288 = vmatprep.subr.mxu0 0.0
    %289 = vmatpush1.msra.mxu0 0.0
    %290 = vmatprep.subr.mxu0 0.0
    %291 = vmatpush1.msra.mxu0 0.0
    %292 = vmatprep.subr.mxu0 0.0
    %293 = vmatpush1.msra.mxu0 0.0
    %294 = vmatprep.subr.mxu0 0.0
    %295 = vmatpush1.msra.mxu0 0.0
    %296 = vmatprep.subr.mxu0 0.0
    %297 = vmatpush1.msra.mxu0 0.0
    %298 = vmatprep.subr.mxu0 0.0
    %299 = vmatpush1.msra.mxu0 0.0
    %300 = vmatprep.subr.mxu0 0.0
    %301 = vmatpush1.msra.mxu0 0.0
    %302 = vmatprep.subr.mxu0 0.0
    %303 = vmatpush1.msra.mxu0 0.0
    %304 = vmatprep.mubr.f32.mxu0 0.0
    %305 = vmatmul.mubr.f32.gmra.mrb[0].mxu0 %v217
    %v306 = vpop.f32.mrb[0].mxu0
    %v307 = vadd.f32 %v178, %v306
    %v308 = vpop.f32.mrb[0].mxu0
    %309 = vmatprep.mubr.f32.mxu0 0.0
    %310 = vmatmul.mubr.f32.gmra.mrb[0].mxu0 %v220
    %v311 = vpop.f32.mrb[0].mxu0
    %v312 = vadd.f32 %v183, %v311
    %v313 = vpop.f32.mrb[0].mxu0
    %314 = vmatprep.mubr.f32.mxu0 0.0
    %315 = vmatmul.mubr.f32.gmra.mrb[0].mxu0 %v223
    %v316 = vpop.f32.mrb[0].mxu0
    %v317 = vadd.f32 %v188, %v316
    %v318 = vpop.f32.mrb[0].mxu0
    %319 = vmatprep.mubr.f32.mxu0 0.0
    %320 = vmatmul.mubr.f32.gmra.mrb[0].mxu0 %v226
    %v321 = vpop.f32.mrb[0].mxu0
    %v322 = vadd.f32 %v193, %v321
    %v323 = vpop.f32.mrb[0].mxu0
    %324 = vmatprep.mubr.f32.mxu0 0.0
    %325 = vmatmul.mubr.f32.gmra.mrb[0].mxu0 %v229
    %v326 = vpop.f32.mrb[0].mxu0
    %v327 = vadd.f32 %v198, %v326
    %v328 = vpop.f32.mrb[0].mxu0
    %329 = vmatprep.mubr.f32.mxu0 0.0
    %330 = vmatmul.mubr.f32.gmra.mrb[0].mxu0 %v232
    %v331 = vpop.f32.mrb[0].mxu0
    %v332 = vadd.f32 %v203, %v331
    %v333 = vpop.f32.mrb[0].mxu0
    %334 = vmatprep.mubr.f32.mxu0 0.0
    %335 = vmatmul.mubr.f32.gmra.mrb[0].mxu0 %v235
    %v336 = vpop.f32.mrb[0].mxu0
    %v337 = vadd.f32 %v208, %v336
    %v338 = vpop.f32.mrb[0].mxu0
    %339 = vmatprep.mubr.f32.mxu0 0.0
    %340 = vmatmul.mubr.f32.gmra.mrb[0].mxu0 %v238
    %v341 = vpop.f32.mrb[0].mxu0
    %v342 = vadd.f32 %v213, %v341
    %v343 = vpop.f32.mrb[0].mxu0
    %344 = vdwg.mxu0
    %s345 = scalar_lea.vmem [#allocation3], 160
    %v346 = vld [vmem:[%s345] sm:$0xff]
    %v347 = vld [vmem:[%s345 + $0x8] sm:$0xff]
    %v348 = vld [vmem:[%s345 + $0x10] sm:$0xff]
    %v349 = vld [vmem:[%s345 + $0x18] sm:$0xff]
    %v350 = vld [vmem:[%s345 + $0x20] sm:$0xff]
    %v351 = vld [vmem:[%s345 + $0x28] sm:$0xff]
    %v352 = vld [vmem:[%s345 + $0x30] sm:$0xff]
    %v353 = vld [vmem:[%s345 + $0x38] sm:$0xff]
    %s354 = scalar_lea.vmem [#allocation6], 48
    %v355 = vld [vmem:[%s354] sm:$0xff]
    %v356 = vld [vmem:[%s354 + $0x8] sm:$0xff]
    %v357 = vld [vmem:[%s354 + $0x10] sm:$0xff]
    %v359 = vsel %vm86, %v346, 0
    %v362 = vsel %vm86, %v347, 0
    %v365 = vsel %vm86, %v348, 0
    %v368 = vsel %vm86, %v349, 0
    %v371 = vsel %vm86, %v350, 0
    %v374 = vsel %vm86, %v351, 0
    %v377 = vsel %vm86, %v352, 0
    %v380 = vsel %vm86, %v353, 0
    %382 = vmatprep.subr.mxu0 0.0
    %383 = vmatpush1.msra.mxu0 %v355
    %384 = vmatprep.subr.mxu0 0.0
    %385 = vmatpush1.msra.mxu0 %v356
    %386 = vmatprep.subr.mxu0 0.0
    %387 = vmatpush1.msra.mxu0 %v357
    %388 = vmatprep.subr.mxu0 0.0
    %389 = vmatpush1.msra.mxu0 0.0
    %390 = vmatprep.subr.mxu0 0.0
    %391 = vmatpush1.msra.mxu0 0.0
    %392 = vmatprep.subr.mxu0 0.0
    %393 = vmatpush1.msra.mxu0 0.0
    %394 = vmatprep.subr.mxu0 0.0
    %395 = vmatpush1.msra.mxu0 0.0
    %396 = vmatprep.subr.mxu0 0.0
    %397 = vmatpush1.msra.mxu0 0.0
    %398 = vmatprep.subr.mxu0 0.0
    %399 = vmatpush1.msra.mxu0 0.0
    %400 = vmatprep.subr.mxu0 0.0
    %401 = vmatpush1.msra.mxu0 0.0
    %402 = vmatprep.subr.mxu0 0.0
    %403 = vmatpush1.msra.mxu0 0.0
    %404 = vmatprep.subr.mxu0 0.0
    %405 = vmatpush1.msra.mxu0 0.0
    %406 = vmatprep.subr.mxu0 0.0
    %407 = vmatpush1.msra.mxu0 0.0
    %408 = vmatprep.subr.mxu0 0.0
    %409 = vmatpush1.msra.mxu0 0.0
    %410 = vmatprep.subr.mxu0 0.0
    %411 = vmatpush1.msra.mxu0 0.0
    %412 = vmatprep.subr.mxu0 0.0
    %413 = vmatpush1.msra.mxu0 0.0
    %414 = vmatprep.subr.mxu0 0.0
    %415 = vmatpush1.msra.mxu0 0.0
    %416 = vmatprep.subr.mxu0 0.0
    %417 = vmatpush1.msra.mxu0 0.0
    %418 = vmatprep.subr.mxu0 0.0
    %419 = vmatpush1.msra.mxu0 0.0
    %420 = vmatprep.subr.mxu0 0.0
    %421 = vmatpush1.msra.mxu0 0.0
    %422 = vmatprep.subr.mxu0 0.0
    %423 = vmatpush1.msra.mxu0 0.0
    %424 = vmatprep.subr.mxu0 0.0
    %425 = vmatpush1.msra.mxu0 0.0
    %426 = vmatprep.subr.mxu0 0.0
    %427 = vmatpush1.msra.mxu0 0.0
    %428 = vmatprep.subr.mxu0 0.0
    %429 = vmatpush1.msra.mxu0 0.0
    %430 = vmatprep.subr.mxu0 0.0
    %431 = vmatpush1.msra.mxu0 0.0
    %432 = vmatprep.subr.mxu0 0.0
    %433 = vmatpush1.msra.mxu0 0.0
    %434 = vmatprep.subr.mxu0 0.0
    %435 = vmatpush1.msra.mxu0 0.0
    %436 = vmatprep.subr.mxu0 0.0
    %437 = vmatpush1.msra.mxu0 0.0
    %438 = vmatprep.subr.mxu0 0.0
    %439 = vmatpush1.msra.mxu0 0.0
    %440 = vmatprep.subr.mxu0 0.0
    %441 = vmatpush1.msra.mxu0 0.0
    %442 = vmatprep.subr.mxu0 0.0
    %443 = vmatpush1.msra.mxu0 0.0
    %444 = vmatprep.subr.mxu0 0.0
    %445 = vmatpush1.msra.mxu0 0.0
    %446 = vmatprep.mubr.f32.mxu0 0.0
    %447 = vmatmul.mubr.f32.gmra.mrb[0].mxu0 %v359
    %v448 = vpop.f32.mrb[0].mxu0
    %v449 = vadd.f32 0.0, %v448
    %v450 = vpop.f32.mrb[0].mxu0
    %451 = vmatprep.mubr.f32.mxu0 0.0
    %452 = vmatmul.mubr.f32.gmra.mrb[0].mxu0 %v362
    %v453 = vpop.f32.mrb[0].mxu0
    %v454 = vadd.f32 0.0, %v453
    %v455 = vpop.f32.mrb[0].mxu0
    %456 = vmatprep.mubr.f32.mxu0 0.0
    %457 = vmatmul.mubr.f32.gmra.mrb[0].mxu0 %v365
    %v458 = vpop.f32.mrb[0].mxu0
    %v459 = vadd.f32 0.0, %v458
    %v460 = vpop.f32.mrb[0].mxu0
    %461 = vmatprep.mubr.f32.mxu0 0.0
    %462 = vmatmul.mubr.f32.gmra.mrb[0].mxu0 %v368
    %v463 = vpop.f32.mrb[0].mxu0
    %v464 = vadd.f32 0.0, %v463
    %v465 = vpop.f32.mrb[0].mxu0
    %466 = vmatprep.mubr.f32.mxu0 0.0
    %467 = vmatmul.mubr.f32.gmra.mrb[0].mxu0 %v371
    %v468 = vpop.f32.mrb[0].mxu0
    %v469 = vadd.f32 0.0, %v468
    %v470 = vpop.f32.mrb[0].mxu0
    %471 = vmatprep.mubr.f32.mxu0 0.0
    %472 = vmatmul.mubr.f32.gmra.mrb[0].mxu0 %v374
    %v473 = vpop.f32.mrb[0].mxu0
    %v474 = vadd.f32 0.0, %v473
    %v475 = vpop.f32.mrb[0].mxu0
    %476 = vmatprep.mubr.f32.mxu0 0.0
    %477 = vmatmul.mubr.f32.gmra.mrb[0].mxu0 %v377
    %v478 = vpop.f32.mrb[0].mxu0
    %v479 = vadd.f32 0.0, %v478
    %v480 = vpop.f32.mrb[0].mxu0
    %481 = vmatprep.mubr.f32.mxu0 0.0
    %482 = vmatmul.mubr.f32.gmra.mrb[0].mxu0 %v380
    %v483 = vpop.f32.mrb[0].mxu0
    %v484 = vadd.f32 0.0, %v483
    %v485 = vpop.f32.mrb[0].mxu0
    %486 = vdwg.mxu0
    %v487 = vadd.f32 %v307, %v449
    %v488 = vadd.f32 %v312, %v454
    %v489 = vadd.f32 %v317, %v459
    %v490 = vadd.f32 %v322, %v464
    %v491 = vadd.f32 %v327, %v469
    %v492 = vadd.f32 %v332, %v474
    %v493 = vadd.f32 %v337, %v479
    %v494 = vadd.f32 %v342, %v484
    %s495 = scalar_lea.vmem [#allocation3], 240
    %v496 = vld [vmem:[%s495] sm:$0xff]
    %v497 = vld [vmem:[%s495 + $0x8] sm:$0xff]
    %v498 = vld [vmem:[%s495 + $0x10] sm:$0xff]
    %v499 = vld [vmem:[%s495 + $0x18] sm:$0xff]
    %v500 = vld [vmem:[%s495 + $0x20] sm:$0xff]
    %v501 = vld [vmem:[%s495 + $0x28] sm:$0xff]
    %v502 = vld [vmem:[%s495 + $0x30] sm:$0xff]
    %v503 = vld [vmem:[%s495 + $0x38] sm:$0xff]
    %s504 = scalar_lea.vmem [#allocation6], 72
    %v505 = vld [vmem:[%s504] sm:$0xff]
    %v506 = vld [vmem:[%s504 + $0x8] sm:$0xff]
    %v507 = vld [vmem:[%s504 + $0x10] sm:$0xff]
    %v509 = vsel %vm86, %v496, 0
    %v512 = vsel %vm86, %v497, 0
    %v515 = vsel %vm86, %v498, 0
    %v518 = vsel %vm86, %v499, 0
    %v521 = vsel %vm86, %v500, 0
    %v524 = vsel %vm86, %v501, 0
    %v527 = vsel %vm86, %v502, 0
    %v530 = vsel %vm86, %v503, 0
    %532 = vmatprep.subr.mxu0 0.0
    %533 = vmatpush1.msra.mxu0 %v505
    %534 = vmatprep.subr.mxu0 0.0
    %535 = vmatpush1.msra.mxu0 %v506
    %536 = vmatprep.subr.mxu0 0.0
    %537 = vmatpush1.msra.mxu0 %v507
    %538 = vmatprep.subr.mxu0 0.0
    %539 = vmatpush1.msra.mxu0 0.0
    %540 = vmatprep.subr.mxu0 0.0
    %541 = vmatpush1.msra.mxu0 0.0
    %542 = vmatprep.subr.mxu0 0.0
    %543 = vmatpush1.msra.mxu0 0.0
    %544 = vmatprep.subr.mxu0 0.0
    %545 = vmatpush1.msra.mxu0 0.0
    %546 = vmatprep.subr.mxu0 0.0
    %547 = vmatpush1.msra.mxu0 0.0
    %548 = vmatprep.subr.mxu0 0.0
    %549 = vmatpush1.msra.mxu0 0.0
    %550 = vmatprep.subr.mxu0 0.0
    %551 = vmatpush1.msra.mxu0 0.0
    %552 = vmatprep.subr.mxu0 0.0
    %553 = vmatpush1.msra.mxu0 0.0
    %554 = vmatprep.subr.mxu0 0.0
    %555 = vmatpush1.msra.mxu0 0.0
    %556 = vmatprep.subr.mxu0 0.0
    %557 = vmatpush1.msra.mxu0 0.0
    %558 = vmatprep.subr.mxu0 0.0
    %559 = vmatpush1.msra.mxu0 0.0
    %560 = vmatprep.subr.mxu0 0.0
    %561 = vmatpush1.msra.mxu0 0.0
    %562 = vmatprep.subr.mxu0 0.0
    %563 = vmatpush1.msra.mxu0 0.0
    %564 = vmatprep.subr.mxu0 0.0
    %565 = vmatpush1.msra.mxu0 0.0
    %566 = vmatprep.subr.mxu0 0.0
    %567 = vmatpush1.msra.mxu0 0.0
    %568 = vmatprep.subr.mxu0 0.0
    %569 = vmatpush1.msra.mxu0 0.0
    %570 = vmatprep.subr.mxu0 0.0
    %571 = vmatpush1.msra.mxu0 0.0
    %572 = vmatprep.subr.mxu0 0.0
    %573 = vmatpush1.msra.mxu0 0.0
    %574 = vmatprep.subr.mxu0 0.0
    %575 = vmatpush1.msra.mxu0 0.0
    %576 = vmatprep.subr.mxu0 0.0
    %577 = vmatpush1.msra.mxu0 0.0
    %578 = vmatprep.subr.mxu0 0.0
    %579 = vmatpush1.msra.mxu0 0.0
    %580 = vmatprep.subr.mxu0 0.0
    %581 = vmatpush1.msra.mxu0 0.0
    %582 = vmatprep.subr.mxu0 0.0
    %583 = vmatpush1.msra.mxu0 0.0
    %584 = vmatprep.subr.mxu0 0.0
    %585 = vmatpush1.msra.mxu0 0.0
    %586 = vmatprep.subr.mxu0 0.0
    %587 = vmatpush1.msra.mxu0 0.0
    %588 = vmatprep.subr.mxu0 0.0
    %589 = vmatpush1.msra.mxu0 0.0
    %590 = vmatprep.subr.mxu0 0.0
    %591 = vmatpush1.msra.mxu0 0.0
    %592 = vmatprep.subr.mxu0 0.0
    %593 = vmatpush1.msra.mxu0 0.0
    %594 = vmatprep.subr.mxu0 0.0
    %595 = vmatpush1.msra.mxu0 0.0
    %596 = vmatprep.mubr.f32.mxu0 0.0
    %597 = vmatmul.mubr.f32.gmra.mrb[0].mxu0 %v509
    %v598 = vpop.f32.mrb[0].mxu0
    %v599 = vadd.f32 0.0, %v598
    %v600 = vpop.f32.mrb[0].mxu0
    %601 = vmatprep.mubr.f32.mxu0 0.0
    %602 = vmatmul.mubr.f32.gmra.mrb[0].mxu0 %v512
    %v603 = vpop.f32.mrb[0].mxu0
    %v604 = vadd.f32 0.0, %v603
    %v605 = vpop.f32.mrb[0].mxu0
    %606 = vmatprep.mubr.f32.mxu0 0.0
    %607 = vmatmul.mubr.f32.gmra.mrb[0].mxu0 %v515
    %v608 = vpop.f32.mrb[0].mxu0
    %v609 = vadd.f32 0.0, %v608
    %v610 = vpop.f32.mrb[0].mxu0
    %611 = vmatprep.mubr.f32.mxu0 0.0
    %612 = vmatmul.mubr.f32.gmra.mrb[0].mxu0 %v518
    %v613 = vpop.f32.mrb[0].mxu0
    %v614 = vadd.f32 0.0, %v613
    %v615 = vpop.f32.mrb[0].mxu0
    %616 = vmatprep.mubr.f32.mxu0 0.0
    %617 = vmatmul.mubr.f32.gmra.mrb[0].mxu0 %v521
    %v618 = vpop.f32.mrb[0].mxu0
    %v619 = vadd.f32 0.0, %v618
    %v620 = vpop.f32.mrb[0].mxu0
    %621 = vmatprep.mubr.f32.mxu0 0.0
    %622 = vmatmul.mubr.f32.gmra.mrb[0].mxu0 %v524
    %v623 = vpop.f32.mrb[0].mxu0
    %v624 = vadd.f32 0.0, %v623
    %v625 = vpop.f32.mrb[0].mxu0
    %626 = vmatprep.mubr.f32.mxu0 0.0
    %627 = vmatmul.mubr.f32.gmra.mrb[0].mxu0 %v527
    %v628 = vpop.f32.mrb[0].mxu0
    %v629 = vadd.f32 0.0, %v628
    %v630 = vpop.f32.mrb[0].mxu0
    %631 = vmatprep.mubr.f32.mxu0 0.0
    %632 = vmatmul.mubr.f32.gmra.mrb[0].mxu0 %v530
    %v633 = vpop.f32.mrb[0].mxu0
    %v634 = vadd.f32 0.0, %v633
    %v635 = vpop.f32.mrb[0].mxu0
    %636 = vdwg.mxu0
    %v637 = vadd.f32 %v487, %v599
    %v638 = vadd.f32 %v488, %v604
    %v639 = vadd.f32 %v489, %v609
    %v640 = vadd.f32 %v490, %v614
    %v641 = vadd.f32 %v491, %v619
    %v642 = vadd.f32 %v492, %v624
    %v643 = vadd.f32 %v493, %v629
    %v644 = vadd.f32 %v494, %v634
    %s645 = scalar_lea.vmem [#allocation3], 8
    %v646 = vld [vmem:[%s645] sm:$0xff]
    %v647 = vld [vmem:[%s645 + $0x8] sm:$0xff]
    %v648 = vld [vmem:[%s645 + $0x10] sm:$0xff]
    %v649 = vld [vmem:[%s645 + $0x18] sm:$0xff]
    %v650 = vld [vmem:[%s645 + $0x20] sm:$0xff]
    %v651 = vld [vmem:[%s645 + $0x28] sm:$0xff]
    %v652 = vld [vmem:[%s645 + $0x30] sm:$0xff]
    %v653 = vld [vmem:[%s645 + $0x38] sm:$0xff]
    %s654 = scalar_lea.vmem [#allocation6], 96
    %v655 = vld [vmem:[%s654] sm:$0xff]
    %v656 = vld [vmem:[%s654 + $0x8] sm:$0xff]
    %v657 = vld [vmem:[%s654 + $0x10] sm:$0xff]
    %v659 = vsel %vm86, %v646, 0
    %v662 = vsel %vm86, %v647, 0
    %v665 = vsel %vm86, %v648, 0
    %v668 = vsel %vm86, %v649, 0
    %v671 = vsel %vm86, %v650, 0
    %v674 = vsel %vm86, %v651, 0
    %v677 = vsel %vm86, %v652, 0
    %v680 = vsel %vm86, %v653, 0
    %682 = vmatprep.subr.mxu0 0.0
    %683 = vmatpush1.msra.mxu0 %v655
    %684 = vmatprep.subr.mxu0 0.0
    %685 = vmatpush1.msra.mxu0 %v656
    %686 = vmatprep.subr.mxu0 0.0
    %687 = vmatpush1.msra.mxu0 %v657
    %688 = vmatprep.subr.mxu0 0.0
    %689 = vmatpush1.msra.mxu0 0.0
    %690 = vmatprep.subr.mxu0 0.0
    %691 = vmatpush1.msra.mxu0 0.0
    %692 = vmatprep.subr.mxu0 0.0
    %693 = vmatpush1.msra.mxu0 0.0
    %694 = vmatprep.subr.mxu0 0.0
    %695 = vmatpush1.msra.mxu0 0.0
    %696 = vmatprep.subr.mxu0 0.0
    %697 = vmatpush1.msra.mxu0 0.0
    %698 = vmatprep.subr.mxu0 0.0
    %699 = vmatpush1.msra.mxu0 0.0
    %700 = vmatprep.subr.mxu0 0.0
    %701 = vmatpush1.msra.mxu0 0.0
    %702 = vmatprep.subr.mxu0 0.0
    %703 = vmatpush1.msra.mxu0 0.0
    %704 = vmatprep.subr.mxu0 0.0
    %705 = vmatpush1.msra.mxu0 0.0
    %706 = vmatprep.subr.mxu0 0.0
    %707 = vmatpush1.msra.mxu0 0.0
    %708 = vmatprep.subr.mxu0 0.0
    %709 = vmatpush1.msra.mxu0 0.0
    %710 = vmatprep.subr.mxu0 0.0
    %711 = vmatpush1.msra.mxu0 0.0
    %712 = vmatprep.subr.mxu0 0.0
    %713 = vmatpush1.msra.mxu0 0.0
    %714 = vmatprep.subr.mxu0 0.0
    %715 = vmatpush1.msra.mxu0 0.0
    %716 = vmatprep.subr.mxu0 0.0
    %717 = vmatpush1.msra.mxu0 0.0
    %718 = vmatprep.subr.mxu0 0.0
    %719 = vmatpush1.msra.mxu0 0.0
    %720 = vmatprep.subr.mxu0 0.0
    %721 = vmatpush1.msra.mxu0 0.0
    %722 = vmatprep.subr.mxu0 0.0
    %723 = vmatpush1.msra.mxu0 0.0
    %724 = vmatprep.subr.mxu0 0.0
    %725 = vmatpush1.msra.mxu0 0.0
    %726 = vmatprep.subr.mxu0 0.0
    %727 = vmatpush1.msra.mxu0 0.0
    %728 = vmatprep.subr.mxu0 0.0
    %729 = vmatpush1.msra.mxu0 0.0
    %730 = vmatprep.subr.mxu0 0.0
    %731 = vmatpush1.msra.mxu0 0.0
    %732 = vmatprep.subr.mxu0 0.0
    %733 = vmatpush1.msra.mxu0 0.0
    %734 = vmatprep.subr.mxu0 0.0
    %735 = vmatpush1.msra.mxu0 0.0
    %736 = vmatprep.subr.mxu0 0.0
    %737 = vmatpush1.msra.mxu0 0.0
    %738 = vmatprep.subr.mxu0 0.0
    %739 = vmatpush1.msra.mxu0 0.0
    %740 = vmatprep.subr.mxu0 0.0
    %741 = vmatpush1.msra.mxu0 0.0
    %742 = vmatprep.subr.mxu0 0.0
    %743 = vmatpush1.msra.mxu0 0.0
    %744 = vmatprep.subr.mxu0 0.0
    %745 = vmatpush1.msra.mxu0 0.0
    %746 = vmatprep.mubr.f32.mxu0 0.0
    %747 = vmatmul.mubr.f32.gmra.mrb[0].mxu0 %v659
    %v748 = vpop.f32.mrb[0].mxu0
    %v749 = vadd.f32 0.0, %v748
    %v750 = vpop.f32.mrb[0].mxu0
    %751 = vmatprep.mubr.f32.mxu0 0.0
    %752 = vmatmul.mubr.f32.gmra.mrb[0].mxu0 %v662
    %v753 = vpop.f32.mrb[0].mxu0
    %v754 = vadd.f32 0.0, %v753
    %v755 = vpop.f32.mrb[0].mxu0
    %756 = vmatprep.mubr.f32.mxu0 0.0
    %757 = vmatmul.mubr.f32.gmra.mrb[0].mxu0 %v665
    %v758 = vpop.f32.mrb[0].mxu0
    %v759 = vadd.f32 0.0, %v758
    %v760 = vpop.f32.mrb[0].mxu0
    %761 = vmatprep.mubr.f32.mxu0 0.0
    %762 = vmatmul.mubr.f32.gmra.mrb[0].mxu0 %v668
    %v763 = vpop.f32.mrb[0].mxu0
    %v764 = vadd.f32 0.0, %v763
    %v765 = vpop.f32.mrb[0].mxu0
    %766 = vmatprep.mubr.f32.mxu0 0.0
    %767 = vmatmul.mubr.f32.gmra.mrb[0].mxu0 %v671
    %v768 = vpop.f32.mrb[0].mxu0
    %v769 = vadd.f32 0.0, %v768
    %v770 = vpop.f32.mrb[0].mxu0
    %771 = vmatprep.mubr.f32.mxu0 0.0
    %772 = vmatmul.mubr.f32.gmra.mrb[0].mxu0 %v674
    %v773 = vpop.f32.mrb[0].mxu0
    %v774 = vadd.f32 0.0, %v773
    %v775 = vpop.f32.mrb[0].mxu0
    %776 = vmatprep.mubr.f32.mxu0 0.0
    %777 = vmatmul.mubr.f32.gmra.mrb[0].mxu0 %v677
    %v778 = vpop.f32.mrb[0].mxu0
    %v779 = vadd.f32 0.0, %v778
    %v780 = vpop.f32.mrb[0].mxu0
    %781 = vmatprep.mubr.f32.mxu0 0.0
    %782 = vmatmul.mubr.f32.gmra.mrb[0].mxu0 %v680
    %v783 = vpop.f32.mrb[0].mxu0
    %v784 = vadd.f32 0.0, %v783
    %v785 = vpop.f32.mrb[0].mxu0
    %786 = vdwg.mxu0
    %v787 = vadd.f32 %v637, %v749
    %v788 = vadd.f32 %v638, %v754
    %v789 = vadd.f32 %v639, %v759
    %v790 = vadd.f32 %v640, %v764
    %v791 = vadd.f32 %v641, %v769
    %v792 = vadd.f32 %v642, %v774
    %v793 = vadd.f32 %v643, %v779
    %v794 = vadd.f32 %v644, %v784
    %s795 = scalar_lea.vmem [#allocation3], 88
    %v796 = vld [vmem:[%s795] sm:$0xff]
    %v797 = vld [vmem:[%s795 + $0x8] sm:$0xff]
    %v798 = vld [vmem:[%s795 + $0x10] sm:$0xff]
    %v799 = vld [vmem:[%s795 + $0x18] sm:$0xff]
    %v800 = vld [vmem:[%s795 + $0x20] sm:$0xff]
    %v801 = vld [vmem:[%s795 + $0x28] sm:$0xff]
    %v802 = vld [vmem:[%s795 + $0x30] sm:$0xff]
    %v803 = vld [vmem:[%s795 + $0x38] sm:$0xff]
    %s804 = scalar_lea.vmem [#allocation6], 120
    %v805 = vld [vmem:[%s804] sm:$0xff]
    %v806 = vld [vmem:[%s804 + $0x8] sm:$0xff]
    %v807 = vld [vmem:[%s804 + $0x10] sm:$0xff]
    %v809 = vsel %vm86, %v796, 0
    %v812 = vsel %vm86, %v797, 0
    %v815 = vsel %vm86, %v798, 0
    %v818 = vsel %vm86, %v799, 0
    %v821 = vsel %vm86, %v800, 0
    %v824 = vsel %vm86, %v801, 0
    %v827 = vsel %vm86, %v802, 0
    %v830 = vsel %vm86, %v803, 0
    %832 = vmatprep.subr.mxu0 0.0
    %833 = vmatpush1.msra.mxu0 %v805
    %834 = vmatprep.subr.mxu0 0.0
    %835 = vmatpush1.msra.mxu0 %v806
    %836 = vmatprep.subr.mxu0 0.0
    %837 = vmatpush1.msra.mxu0 %v807
    %838 = vmatprep.subr.mxu0 0.0
    %839 = vmatpush1.msra.mxu0 0.0
    %840 = vmatprep.subr.mxu0 0.0
    %841 = vmatpush1.msra.mxu0 0.0
    %842 = vmatprep.subr.mxu0 0.0
    %843 = vmatpush1.msra.mxu0 0.0
    %844 = vmatprep.subr.mxu0 0.0
    %845 = vmatpush1.msra.mxu0 0.0
    %846 = vmatprep.subr.mxu0 0.0
    %847 = vmatpush1.msra.mxu0 0.0
    %848 = vmatprep.subr.mxu0 0.0
    %849 = vmatpush1.msra.mxu0 0.0
    %850 = vmatprep.subr.mxu0 0.0
    %851 = vmatpush1.msra.mxu0 0.0
    %852 = vmatprep.subr.mxu0 0.0
    %853 = vmatpush1.msra.mxu0 0.0
    %854 = vmatprep.subr.mxu0 0.0
    %855 = vmatpush1.msra.mxu0 0.0
    %856 = vmatprep.subr.mxu0 0.0
    %857 = vmatpush1.msra.mxu0 0.0
    %858 = vmatprep.subr.mxu0 0.0
    %859 = vmatpush1.msra.mxu0 0.0
    %860 = vmatprep.subr.mxu0 0.0
    %861 = vmatpush1.msra.mxu0 0.0
    %862 = vmatprep.subr.mxu0 0.0
    %863 = vmatpush1.msra.mxu0 0.0
    %864 = vmatprep.subr.mxu0 0.0
    %865 = vmatpush1.msra.mxu0 0.0
    %866 = vmatprep.subr.mxu0 0.0
    %867 = vmatpush1.msra.mxu0 0.0
    %868 = vmatprep.subr.mxu0 0.0
    %869 = vmatpush1.msra.mxu0 0.0
    %870 = vmatprep.subr.mxu0 0.0
    %871 = vmatpush1.msra.mxu0 0.0
    %872 = vmatprep.subr.mxu0 0.0
    %873 = vmatpush1.msra.mxu0 0.0
    %874 = vmatprep.subr.mxu0 0.0
    %875 = vmatpush1.msra.mxu0 0.0
    %876 = vmatprep.subr.mxu0 0.0
    %877 = vmatpush1.msra.mxu0 0.0
    %878 = vmatprep.subr.mxu0 0.0
    %879 = vmatpush1.msra.mxu0 0.0
    %880 = vmatprep.subr.mxu0 0.0
    %881 = vmatpush1.msra.mxu0 0.0
    %882 = vmatprep.subr.mxu0 0.0
    %883 = vmatpush1.msra.mxu0 0.0
    %884 = vmatprep.subr.mxu0 0.0
    %885 = vmatpush1.msra.mxu0 0.0
    %886 = vmatprep.subr.mxu0 0.0
    %887 = vmatpush1.msra.mxu0 0.0
    %888 = vmatprep.subr.mxu0 0.0
    %889 = vmatpush1.msra.mxu0 0.0
    %890 = vmatprep.subr.mxu0 0.0
    %891 = vmatpush1.msra.mxu0 0.0
    %892 = vmatprep.subr.mxu0 0.0
    %893 = vmatpush1.msra.mxu0 0.0
    %894 = vmatprep.subr.mxu0 0.0
    %895 = vmatpush1.msra.mxu0 0.0
    %896 = vmatprep.mubr.f32.mxu0 0.0
    %897 = vmatmul.mubr.f32.gmra.mrb[0].mxu0 %v809
    %v898 = vpop.f32.mrb[0].mxu0
    %v899 = vadd.f32 0.0, %v898
    %v900 = vpop.f32.mrb[0].mxu0
    %901 = vmatprep.mubr.f32.mxu0 0.0
    %902 = vmatmul.mubr.f32.gmra.mrb[0].mxu0 %v812
    %v903 = vpop.f32.mrb[0].mxu0
    %v904 = vadd.f32 0.0, %v903
    %v905 = vpop.f32.mrb[0].mxu0
    %906 = vmatprep.mubr.f32.mxu0 0.0
    %907 = vmatmul.mubr.f32.gmra.mrb[0].mxu0 %v815
    %v908 = vpop.f32.mrb[0].mxu0
    %v909 = vadd.f32 0.0, %v908
    %v910 = vpop.f32.mrb[0].mxu0
    %911 = vmatprep.mubr.f32.mxu0 0.0
    %912 = vmatmul.mubr.f32.gmra.mrb[0].mxu0 %v818
    %v913 = vpop.f32.mrb[0].mxu0
    %v914 = vadd.f32 0.0, %v913
    %v915 = vpop.f32.mrb[0].mxu0
    %916 = vmatprep.mubr.f32.mxu0 0.0
    %917 = vmatmul.mubr.f32.gmra.mrb[0].mxu0 %v821
    %v918 = vpop.f32.mrb[0].mxu0
    %v919 = vadd.f32 0.0, %v918
    %v920 = vpop.f32.mrb[0].mxu0
    %921 = vmatprep.mubr.f32.mxu0 0.0
    %922 = vmatmul.mubr.f32.gmra.mrb[0].mxu0 %v824
    %v923 = vpop.f32.mrb[0].mxu0
    %v924 = vadd.f32 0.0, %v923
    %v925 = vpop.f32.mrb[0].mxu0
    %926 = vmatprep.mubr.f32.mxu0 0.0
    %927 = vmatmul.mubr.f32.gmra.mrb[0].mxu0 %v827
    %v928 = vpop.f32.mrb[0].mxu0
    %v929 = vadd.f32 0.0, %v928
    %v930 = vpop.f32.mrb[0].mxu0
    %931 = vmatprep.mubr.f32.mxu0 0.0
    %932 = vmatmul.mubr.f32.gmra.mrb[0].mxu0 %v830
    %v933 = vpop.f32.mrb[0].mxu0
    %v934 = vadd.f32 0.0, %v933
    %v935 = vpop.f32.mrb[0].mxu0
    %936 = vdwg.mxu0
    %v937 = vadd.f32 %v787, %v899
    %v938 = vadd.f32 %v788, %v904
    %v939 = vadd.f32 %v789, %v909
    %v940 = vadd.f32 %v790, %v914
    %v941 = vadd.f32 %v791, %v919
    %v942 = vadd.f32 %v792, %v924
    %v943 = vadd.f32 %v793, %v929
    %v944 = vadd.f32 %v794, %v934
    %s945 = scalar_lea.vmem [#allocation3], 168
    %v946 = vld [vmem:[%s945] sm:$0xff]
    %v947 = vld [vmem:[%s945 + $0x8] sm:$0xff]
    %v948 = vld [vmem:[%s945 + $0x10] sm:$0xff]
    %v949 = vld [vmem:[%s945 + $0x18] sm:$0xff]
    %v950 = vld [vmem:[%s945 + $0x20] sm:$0xff]
    %v951 = vld [vmem:[%s945 + $0x28] sm:$0xff]
    %v952 = vld [vmem:[%s945 + $0x30] sm:$0xff]
    %v953 = vld [vmem:[%s945 + $0x38] sm:$0xff]
    %s954 = scalar_lea.vmem [#allocation6], 144
    %v955 = vld [vmem:[%s954] sm:$0xff]
    %v956 = vld [vmem:[%s954 + $0x8] sm:$0xff]
    %v957 = vld [vmem:[%s954 + $0x10] sm:$0xff]
    %v959 = vsel %vm86, %v946, 0
    %v962 = vsel %vm86, %v947, 0
    %v965 = vsel %vm86, %v948, 0
    %v968 = vsel %vm86, %v949, 0
    %v971 = vsel %vm86, %v950, 0
    %v974 = vsel %vm86, %v951, 0
    %v977 = vsel %vm86, %v952, 0
    %v980 = vsel %vm86, %v953, 0
    %982 = vmatprep.subr.mxu0 0.0
    %983 = vmatpush1.msra.mxu0 %v955
    %984 = vmatprep.subr.mxu0 0.0
    %985 = vmatpush1.msra.mxu0 %v956
    %986 = vmatprep.subr.mxu0 0.0
    %987 = vmatpush1.msra.mxu0 %v957
    %988 = vmatprep.subr.mxu0 0.0
    %989 = vmatpush1.msra.mxu0 0.0
    %990 = vmatprep.subr.mxu0 0.0
    %991 = vmatpush1.msra.mxu0 0.0
    %992 = vmatprep.subr.mxu0 0.0
    %993 = vmatpush1.msra.mxu0 0.0
    %994 = vmatprep.subr.mxu0 0.0
    %995 = vmatpush1.msra.mxu0 0.0
    %996 = vmatprep.subr.mxu0 0.0
    %997 = vmatpush1.msra.mxu0 0.0
    %998 = vmatprep.subr.mxu0 0.0
    %999 = vmatpush1.msra.mxu0 0.0
    %1000 = vmatprep.subr.mxu0 0.0
    %1001 = vmatpush1.msra.mxu0 0.0
    %1002 = vmatprep.subr.mxu0 0.0
    %1003 = vmatpush1.msra.mxu0 0.0
    %1004 = vmatprep.subr.mxu0 0.0
    %1005 = vmatpush1.msra.mxu0 0.0
    %1006 = vmatprep.subr.mxu0 0.0
    %1007 = vmatpush1.msra.mxu0 0.0
    %1008 = vmatprep.subr.mxu0 0.0
    %1009 = vmatpush1.msra.mxu0 0.0
    %1010 = vmatprep.subr.mxu0 0.0
    %1011 = vmatpush1.msra.mxu0 0.0
    %1012 = vmatprep.subr.mxu0 0.0
    %1013 = vmatpush1.msra.mxu0 0.0
    %1014 = vmatprep.subr.mxu0 0.0
    %1015 = vmatpush1.msra.mxu0 0.0
    %1016 = vmatprep.subr.mxu0 0.0
    %1017 = vmatpush1.msra.mxu0 0.0
    %1018 = vmatprep.subr.mxu0 0.0
    %1019 = vmatpush1.msra.mxu0 0.0
    %1020 = vmatprep.subr.mxu0 0.0
    %1021 = vmatpush1.msra.mxu0 0.0
    %1022 = vmatprep.subr.mxu0 0.0
    %1023 = vmatpush1.msra.mxu0 0.0
    %1024 = vmatprep.subr.mxu0 0.0
    %1025 = vmatpush1.msra.mxu0 0.0
    %1026 = vmatprep.subr.mxu0 0.0
    %1027 = vmatpush1.msra.mxu0 0.0
    %1028 = vmatprep.subr.mxu0 0.0
    %1029 = vmatpush1.msra.mxu0 0.0
    %1030 = vmatprep.subr.mxu0 0.0
    %1031 = vmatpush1.msra.mxu0 0.0
    %1032 = vmatprep.subr.mxu0 0.0
    %1033 = vmatpush1.msra.mxu0 0.0
    %1034 = vmatprep.subr.mxu0 0.0
    %1035 = vmatpush1.msra.mxu0 0.0
    %1036 = vmatprep.subr.mxu0 0.0
    %1037 = vmatpush1.msra.mxu0 0.0
    %1038 = vmatprep.subr.mxu0 0.0
    %1039 = vmatpush1.msra.mxu0 0.0
    %1040 = vmatprep.subr.mxu0 0.0
    %1041 = vmatpush1.msra.mxu0 0.0
    %1042 = vmatprep.subr.mxu0 0.0
    %1043 = vmatpush1.msra.mxu0 0.0
    %1044 = vmatprep.subr.mxu0 0.0
    %1045 = vmatpush1.msra.mxu0 0.0
    %1046 = vmatprep.mubr.f32.mxu0 0.0
    %1047 = vmatmul.mubr.f32.gmra.mrb[0].mxu0 %v959
    %v1048 = vpop.f32.mrb[0].mxu0
    %v1049 = vadd.f32 0.0, %v1048
    %v1050 = vpop.f32.mrb[0].mxu0
    %1051 = vmatprep.mubr.f32.mxu0 0.0
    %1052 = vmatmul.mubr.f32.gmra.mrb[0].mxu0 %v962
    %v1053 = vpop.f32.mrb[0].mxu0
    %v1054 = vadd.f32 0.0, %v1053
    %v1055 = vpop.f32.mrb[0].mxu0
    %1056 = vmatprep.mubr.f32.mxu0 0.0
    %1057 = vmatmul.mubr.f32.gmra.mrb[0].mxu0 %v965
    %v1058 = vpop.f32.mrb[0].mxu0
    %v1059 = vadd.f32 0.0, %v1058
    %v1060 = vpop.f32.mrb[0].mxu0
    %1061 = vmatprep.mubr.f32.mxu0 0.0
    %1062 = vmatmul.mubr.f32.gmra.mrb[0].mxu0 %v968
    %v1063 = vpop.f32.mrb[0].mxu0
    %v1064 = vadd.f32 0.0, %v1063
    %v1065 = vpop.f32.mrb[0].mxu0
    %1066 = vmatprep.mubr.f32.mxu0 0.0
    %1067 = vmatmul.mubr.f32.gmra.mrb[0].mxu0 %v971
    %v1068 = vpop.f32.mrb[0].mxu0
    %v1069 = vadd.f32 0.0, %v1068
    %v1070 = vpop.f32.mrb[0].mxu0
    %1071 = vmatprep.mubr.f32.mxu0 0.0
    %1072 = vmatmul.mubr.f32.gmra.mrb[0].mxu0 %v974
    %v1073 = vpop.f32.mrb[0].mxu0
    %v1074 = vadd.f32 0.0, %v1073
    %v1075 = vpop.f32.mrb[0].mxu0
    %1076 = vmatprep.mubr.f32.mxu0 0.0
    %1077 = vmatmul.mubr.f32.gmra.mrb[0].mxu0 %v977
    %v1078 = vpop.f32.mrb[0].mxu0
    %v1079 = vadd.f32 0.0, %v1078
    %v1080 = vpop.f32.mrb[0].mxu0
    %1081 = vmatprep.mubr.f32.mxu0 0.0
    %1082 = vmatmul.mubr.f32.gmra.mrb[0].mxu0 %v980
    %v1083 = vpop.f32.mrb[0].mxu0
    %v1084 = vadd.f32 0.0, %v1083
    %v1085 = vpop.f32.mrb[0].mxu0
    %1086 = vdwg.mxu0
    %v1087 = vadd.f32 %v937, %v1049
    %v1088 = vadd.f32 %v938, %v1054
    %v1089 = vadd.f32 %v939, %v1059
    %v1090 = vadd.f32 %v940, %v1064
    %v1091 = vadd.f32 %v941, %v1069
    %v1092 = vadd.f32 %v942, %v1074
    %v1093 = vadd.f32 %v943, %v1079
    %v1094 = vadd.f32 %v944, %v1084
    %s1095 = scalar_lea.vmem [#allocation3], 248
    %v1096 = vld [vmem:[%s1095] sm:$0xff]
    %v1097 = vld [vmem:[%s1095 + $0x8] sm:$0xff]
    %v1098 = vld [vmem:[%s1095 + $0x10] sm:$0xff]
    %v1099 = vld [vmem:[%s1095 + $0x18] sm:$0xff]
    %v1100 = vld [vmem:[%s1095 + $0x20] sm:$0xff]
    %v1101 = vld [vmem:[%s1095 + $0x28] sm:$0xff]
    %v1102 = vld [vmem:[%s1095 + $0x30] sm:$0xff]
    %v1103 = vld [vmem:[%s1095 + $0x38] sm:$0xff]
    %s1104 = scalar_lea.vmem [#allocation6], 168
    %v1105 = vld [vmem:[%s1104] sm:$0xff]
    %v1106 = vld [vmem:[%s1104 + $0x8] sm:$0xff]
    %v1107 = vld [vmem:[%s1104 + $0x10] sm:$0xff]
    %v1109 = vsel %vm86, %v1096, 0
    %v1112 = vsel %vm86, %v1097, 0
    %v1115 = vsel %vm86, %v1098, 0
    %v1118 = vsel %vm86, %v1099, 0
    %v1121 = vsel %vm86, %v1100, 0
    %v1124 = vsel %vm86, %v1101, 0
    %v1127 = vsel %vm86, %v1102, 0
    %v1130 = vsel %vm86, %v1103, 0
    %1132 = vmatprep.subr.mxu0 0.0
    %1133 = vmatpush1.msra.mxu0 %v1105
    %1134 = vmatprep.subr.mxu0 0.0
    %1135 = vmatpush1.msra.mxu0 %v1106
    %1136 = vmatprep.subr.mxu0 0.0
    %1137 = vmatpush1.msra.mxu0 %v1107
    %1138 = vmatprep.subr.mxu0 0.0
    %1139 = vmatpush1.msra.mxu0 0.0
    %1140 = vmatprep.subr.mxu0 0.0
    %1141 = vmatpush1.msra.mxu0 0.0
    %1142 = vmatprep.subr.mxu0 0.0
    %1143 = vmatpush1.msra.mxu0 0.0
    %1144 = vmatprep.subr.mxu0 0.0
    %1145 = vmatpush1.msra.mxu0 0.0
    %1146 = vmatprep.subr.mxu0 0.0
    %1147 = vmatpush1.msra.mxu0 0.0
    %1148 = vmatprep.subr.mxu0 0.0
    %1149 = vmatpush1.msra.mxu0 0.0
    %1150 = vmatprep.subr.mxu0 0.0
    %1151 = vmatpush1.msra.mxu0 0.0
    %1152 = vmatprep.subr.mxu0 0.0
    %1153 = vmatpush1.msra.mxu0 0.0
    %1154 = vmatprep.subr.mxu0 0.0
    %1155 = vmatpush1.msra.mxu0 0.0
    %1156 = vmatprep.subr.mxu0 0.0
    %1157 = vmatpush1.msra.mxu0 0.0
    %1158 = vmatprep.subr.mxu0 0.0
    %1159 = vmatpush1.msra.mxu0 0.0
    %1160 = vmatprep.subr.mxu0 0.0
    %1161 = vmatpush1.msra.mxu0 0.0
    %1162 = vmatprep.subr.mxu0 0.0
    %1163 = vmatpush1.msra.mxu0 0.0
    %1164 = vmatprep.subr.mxu0 0.0
    %1165 = vmatpush1.msra.mxu0 0.0
    %1166 = vmatprep.subr.mxu0 0.0
    %1167 = vmatpush1.msra.mxu0 0.0
    %1168 = vmatprep.subr.mxu0 0.0
    %1169 = vmatpush1.msra.mxu0 0.0
    %1170 = vmatprep.subr.mxu0 0.0
    %1171 = vmatpush1.msra.mxu0 0.0
    %1172 = vmatprep.subr.mxu0 0.0
    %1173 = vmatpush1.msra.mxu0 0.0
    %1174 = vmatprep.subr.mxu0 0.0
    %1175 = vmatpush1.msra.mxu0 0.0
    %1176 = vmatprep.subr.mxu0 0.0
    %1177 = vmatpush1.msra.mxu0 0.0
    %1178 = vmatprep.subr.mxu0 0.0
    %1179 = vmatpush1.msra.mxu0 0.0
    %1180 = vmatprep.subr.mxu0 0.0
    %1181 = vmatpush1.msra.mxu0 0.0
    %1182 = vmatprep.subr.mxu0 0.0
    %1183 = vmatpush1.msra.mxu0 0.0
    %1184 = vmatprep.subr.mxu0 0.0
    %1185 = vmatpush1.msra.mxu0 0.0
    %1186 = vmatprep.subr.mxu0 0.0
    %1187 = vmatpush1.msra.mxu0 0.0
    %1188 = vmatprep.subr.mxu0 0.0
    %1189 = vmatpush1.msra.mxu0 0.0
    %1190 = vmatprep.subr.mxu0 0.0
    %1191 = vmatpush1.msra.mxu0 0.0
    %1192 = vmatprep.subr.mxu0 0.0
    %1193 = vmatpush1.msra.mxu0 0.0
    %1194 = vmatprep.subr.mxu0 0.0
    %1195 = vmatpush1.msra.mxu0 0.0
    %1196 = vmatprep.mubr.f32.mxu0 0.0
    %1197 = vmatmul.mubr.f32.gmra.mrb[0].mxu0 %v1109
    %v1198 = vpop.f32.mrb[0].mxu0
    %v1199 = vadd.f32 0.0, %v1198
    %v1200 = vpop.f32.mrb[0].mxu0
    %1201 = vmatprep.mubr.f32.mxu0 0.0
    %1202 = vmatmul.mubr.f32.gmra.mrb[0].mxu0 %v1112
    %v1203 = vpop.f32.mrb[0].mxu0
    %v1204 = vadd.f32 0.0, %v1203
    %v1205 = vpop.f32.mrb[0].mxu0
    %1206 = vmatprep.mubr.f32.mxu0 0.0
    %1207 = vmatmul.mubr.f32.gmra.mrb[0].mxu0 %v1115
    %v1208 = vpop.f32.mrb[0].mxu0
    %v1209 = vadd.f32 0.0, %v1208
    %v1210 = vpop.f32.mrb[0].mxu0
    %1211 = vmatprep.mubr.f32.mxu0 0.0
    %1212 = vmatmul.mubr.f32.gmra.mrb[0].mxu0 %v1118
    %v1213 = vpop.f32.mrb[0].mxu0
    %v1214 = vadd.f32 0.0, %v1213
    %v1215 = vpop.f32.mrb[0].mxu0
    %1216 = vmatprep.mubr.f32.mxu0 0.0
    %1217 = vmatmul.mubr.f32.gmra.mrb[0].mxu0 %v1121
    %v1218 = vpop.f32.mrb[0].mxu0
    %v1219 = vadd.f32 0.0, %v1218
    %v1220 = vpop.f32.mrb[0].mxu0
    %1221 = vmatprep.mubr.f32.mxu0 0.0
    %1222 = vmatmul.mubr.f32.gmra.mrb[0].mxu0 %v1124
    %v1223 = vpop.f32.mrb[0].mxu0
    %v1224 = vadd.f32 0.0, %v1223
    %v1225 = vpop.f32.mrb[0].mxu0
    %1226 = vmatprep.mubr.f32.mxu0 0.0
    %1227 = vmatmul.mubr.f32.gmra.mrb[0].mxu0 %v1127
    %v1228 = vpop.f32.mrb[0].mxu0
    %v1229 = vadd.f32 0.0, %v1228
    %v1230 = vpop.f32.mrb[0].mxu0
    %1231 = vmatprep.mubr.f32.mxu0 0.0
    %1232 = vmatmul.mubr.f32.gmra.mrb[0].mxu0 %v1130
    %v1233 = vpop.f32.mrb[0].mxu0
    %v1234 = vadd.f32 0.0, %v1233
    %v1235 = vpop.f32.mrb[0].mxu0
    %1236 = vdwg.mxu0
    %v1237 = vadd.f32 %v1087, %v1199
    %v1238 = vadd.f32 %v1088, %v1204
    %v1239 = vadd.f32 %v1089, %v1209
    %v1240 = vadd.f32 %v1090, %v1214
    %v1241 = vadd.f32 %v1091, %v1219
    %v1242 = vadd.f32 %v1092, %v1224
    %v1243 = vadd.f32 %v1093, %v1229
    %v1244 = vadd.f32 %v1094, %v1234
    %s1245 = scalar_lea.vmem [#allocation3], 16
    %v1246 = vld [vmem:[%s1245] sm:$0xff]
    %v1247 = vld [vmem:[%s1245 + $0x8] sm:$0xff]
    %v1248 = vld [vmem:[%s1245 + $0x10] sm:$0xff]
    %v1249 = vld [vmem:[%s1245 + $0x18] sm:$0xff]
    %v1250 = vld [vmem:[%s1245 + $0x20] sm:$0xff]
    %v1251 = vld [vmem:[%s1245 + $0x28] sm:$0xff]
    %v1252 = vld [vmem:[%s1245 + $0x30] sm:$0xff]
    %v1253 = vld [vmem:[%s1245 + $0x38] sm:$0xff]
    %s1254 = scalar_lea.vmem [#allocation6], 192
    %v1255 = vld [vmem:[%s1254] sm:$0xff]
    %v1256 = vld [vmem:[%s1254 + $0x8] sm:$0xff]
    %v1257 = vld [vmem:[%s1254 + $0x10] sm:$0xff]
    %v1259 = vsel %vm86, %v1246, 0
    %v1262 = vsel %vm86, %v1247, 0
    %v1265 = vsel %vm86, %v1248, 0
    %v1268 = vsel %vm86, %v1249, 0
    %v1271 = vsel %vm86, %v1250, 0
    %v1274 = vsel %vm86, %v1251, 0
    %v1277 = vsel %vm86, %v1252, 0
    %v1280 = vsel %vm86, %v1253, 0
    %1282 = vmatprep.subr.mxu0 0.0
    %1283 = vmatpush1.msra.mxu0 %v1255
    %1284 = vmatprep.subr.mxu0 0.0
    %1285 = vmatpush1.msra.mxu0 %v1256
    %1286 = vmatprep.subr.mxu0 0.0
    %1287 = vmatpush1.msra.mxu0 %v1257
    %1288 = vmatprep.subr.mxu0 0.0
    %1289 = vmatpush1.msra.mxu0 0.0
    %1290 = vmatprep.subr.mxu0 0.0
    %1291 = vmatpush1.msra.mxu0 0.0
    %1292 = vmatprep.subr.mxu0 0.0
    %1293 = vmatpush1.msra.mxu0 0.0
    %1294 = vmatprep.subr.mxu0 0.0
    %1295 = vmatpush1.msra.mxu0 0.0
    %1296 = vmatprep.subr.mxu0 0.0
    %1297 = vmatpush1.msra.mxu0 0.0
    %1298 = vmatprep.subr.mxu0 0.0
    %1299 = vmatpush1.msra.mxu0 0.0
    %1300 = vmatprep.subr.mxu0 0.0
    %1301 = vmatpush1.msra.mxu0 0.0
    %1302 = vmatprep.subr.mxu0 0.0
    %1303 = vmatpush1.msra.mxu0 0.0
    %1304 = vmatprep.subr.mxu0 0.0
    %1305 = vmatpush1.msra.mxu0 0.0
    %1306 = vmatprep.subr.mxu0 0.0
    %1307 = vmatpush1.msra.mxu0 0.0
    %1308 = vmatprep.subr.mxu0 0.0
    %1309 = vmatpush1.msra.mxu0 0.0
    %1310 = vmatprep.subr.mxu0 0.0
    %1311 = vmatpush1.msra.mxu0 0.0
    %1312 = vmatprep.subr.mxu0 0.0
    %1313 = vmatpush1.msra.mxu0 0.0
    %1314 = vmatprep.subr.mxu0 0.0
    %1315 = vmatpush1.msra.mxu0 0.0
    %1316 = vmatprep.subr.mxu0 0.0
    %1317 = vmatpush1.msra.mxu0 0.0
    %1318 = vmatprep.subr.mxu0 0.0
    %1319 = vmatpush1.msra.mxu0 0.0
    %1320 = vmatprep.subr.mxu0 0.0
    %1321 = vmatpush1.msra.mxu0 0.0
    %1322 = vmatprep.subr.mxu0 0.0
    %1323 = vmatpush1.msra.mxu0 0.0
    %1324 = vmatprep.subr.mxu0 0.0
    %1325 = vmatpush1.msra.mxu0 0.0
    %1326 = vmatprep.subr.mxu0 0.0
    %1327 = vmatpush1.msra.mxu0 0.0
    %1328 = vmatprep.subr.mxu0 0.0
    %1329 = vmatpush1.msra.mxu0 0.0
    %1330 = vmatprep.subr.mxu0 0.0
    %1331 = vmatpush1.msra.mxu0 0.0
    %1332 = vmatprep.subr.mxu0 0.0
    %1333 = vmatpush1.msra.mxu0 0.0
    %1334 = vmatprep.subr.mxu0 0.0
    %1335 = vmatpush1.msra.mxu0 0.0
    %1336 = vmatprep.subr.mxu0 0.0
    %1337 = vmatpush1.msra.mxu0 0.0
    %1338 = vmatprep.subr.mxu0 0.0
    %1339 = vmatpush1.msra.mxu0 0.0
    %1340 = vmatprep.subr.mxu0 0.0
    %1341 = vmatpush1.msra.mxu0 0.0
    %1342 = vmatprep.subr.mxu0 0.0
    %1343 = vmatpush1.msra.mxu0 0.0
    %1344 = vmatprep.subr.mxu0 0.0
    %1345 = vmatpush1.msra.mxu0 0.0
    %1346 = vmatprep.mubr.f32.mxu0 0.0
    %1347 = vmatmul.mubr.f32.gmra.mrb[0].mxu0 %v1259
    %v1348 = vpop.f32.mrb[0].mxu0
    %v1349 = vadd.f32 0.0, %v1348
    %v1350 = vpop.f32.mrb[0].mxu0
    %1351 = vmatprep.mubr.f32.mxu0 0.0
    %1352 = vmatmul.mubr.f32.gmra.mrb[0].mxu0 %v1262
    %v1353 = vpop.f32.mrb[0].mxu0
    %v1354 = vadd.f32 0.0, %v1353
    %v1355 = vpop.f32.mrb[0].mxu0
    %1356 = vmatprep.mubr.f32.mxu0 0.0
    %1357 = vmatmul.mubr.f32.gmra.mrb[0].mxu0 %v1265
    %v1358 = vpop.f32.mrb[0].mxu0
    %v1359 = vadd.f32 0.0, %v1358
    %v1360 = vpop.f32.mrb[0].mxu0
    %1361 = vmatprep.mubr.f32.mxu0 0.0
    %1362 = vmatmul.mubr.f32.gmra.mrb[0].mxu0 %v1268
    %v1363 = vpop.f32.mrb[0].mxu0
    %v1364 = vadd.f32 0.0, %v1363
    %v1365 = vpop.f32.mrb[0].mxu0
    %1366 = vmatprep.mubr.f32.mxu0 0.0
    %1367 = vmatmul.mubr.f32.gmra.mrb[0].mxu0 %v1271
    %v1368 = vpop.f32.mrb[0].mxu0
    %v1369 = vadd.f32 0.0, %v1368
    %v1370 = vpop.f32.mrb[0].mxu0
    %1371 = vmatprep.mubr.f32.mxu0 0.0
    %1372 = vmatmul.mubr.f32.gmra.mrb[0].mxu0 %v1274
    %v1373 = vpop.f32.mrb[0].mxu0
    %v1374 = vadd.f32 0.0, %v1373
    %v1375 = vpop.f32.mrb[0].mxu0
    %1376 = vmatprep.mubr.f32.mxu0 0.0
    %1377 = vmatmul.mubr.f32.gmra.mrb[0].mxu0 %v1277
    %v1378 = vpop.f32.mrb[0].mxu0
    %v1379 = vadd.f32 0.0, %v1378
    %v1380 = vpop.f32.mrb[0].mxu0
    %1381 = vmatprep.mubr.f32.mxu0 0.0
    %1382 = vmatmul.mubr.f32.gmra.mrb[0].mxu0 %v1280
    %v1383 = vpop.f32.mrb[0].mxu0
    %v1384 = vadd.f32 0.0, %v1383
    %v1385 = vpop.f32.mrb[0].mxu0
    %1386 = vdwg.mxu0
    %v1387 = vadd.f32 %v1237, %v1349
    %v1388 = vadd.f32 %v1238, %v1354
    %v1389 = vadd.f32 %v1239, %v1359
    %v1390 = vadd.f32 %v1240, %v1364
    %v1391 = vadd.f32 %v1241, %v1369
    %v1392 = vadd.f32 %v1242, %v1374
    %v1393 = vadd.f32 %v1243, %v1379
    %v1394 = vadd.f32 %v1244, %v1384
    %s1395 = scalar_lea.vmem [#allocation3], 96
    %v1396 = vld [vmem:[%s1395] sm:$0xff]
    %v1397 = vld [vmem:[%s1395 + $0x8] sm:$0xff]
    %v1398 = vld [vmem:[%s1395 + $0x10] sm:$0xff]
    %v1399 = vld [vmem:[%s1395 + $0x18] sm:$0xff]
    %v1400 = vld [vmem:[%s1395 + $0x20] sm:$0xff]
    %v1401 = vld [vmem:[%s1395 + $0x28] sm:$0xff]
    %v1402 = vld [vmem:[%s1395 + $0x30] sm:$0xff]
    %v1403 = vld [vmem:[%s1395 + $0x38] sm:$0xff]
    %s1404 = scalar_lea.vmem [#allocation6], 216
    %v1405 = vld [vmem:[%s1404] sm:$0xff]
    %v1406 = vld [vmem:[%s1404 + $0x8] sm:$0xff]
    %v1407 = vld [vmem:[%s1404 + $0x10] sm:$0xff]
    %v1409 = vsel %vm86, %v1396, 0
    %v1412 = vsel %vm86, %v1397, 0
    %v1415 = vsel %vm86, %v1398, 0
    %v1418 = vsel %vm86, %v1399, 0
    %v1421 = vsel %vm86, %v1400, 0
    %v1424 = vsel %vm86, %v1401, 0
    %v1427 = vsel %vm86, %v1402, 0
    %v1430 = vsel %vm86, %v1403, 0
    %1432 = vmatprep.subr.mxu0 0.0
    %1433 = vmatpush1.msra.mxu0 %v1405
    %1434 = vmatprep.subr.mxu0 0.0
    %1435 = vmatpush1.msra.mxu0 %v1406
    %1436 = vmatprep.subr.mxu0 0.0
    %1437 = vmatpush1.msra.mxu0 %v1407
    %1438 = vmatprep.subr.mxu0 0.0
    %1439 = vmatpush1.msra.mxu0 0.0
    %1440 = vmatprep.subr.mxu0 0.0
    %1441 = vmatpush1.msra.mxu0 0.0
    %1442 = vmatprep.subr.mxu0 0.0
    %1443 = vmatpush1.msra.mxu0 0.0
    %1444 = vmatprep.subr.mxu0 0.0
    %1445 = vmatpush1.msra.mxu0 0.0
    %1446 = vmatprep.subr.mxu0 0.0
    %1447 = vmatpush1.msra.mxu0 0.0
    %1448 = vmatprep.subr.mxu0 0.0
    %1449 = vmatpush1.msra.mxu0 0.0
    %1450 = vmatprep.subr.mxu0 0.0
    %1451 = vmatpush1.msra.mxu0 0.0
    %1452 = vmatprep.subr.mxu0 0.0
    %1453 = vmatpush1.msra.mxu0 0.0
    %1454 = vmatprep.subr.mxu0 0.0
    %1455 = vmatpush1.msra.mxu0 0.0
    %1456 = vmatprep.subr.mxu0 0.0
    %1457 = vmatpush1.msra.mxu0 0.0
    %1458 = vmatprep.subr.mxu0 0.0
    %1459 = vmatpush1.msra.mxu0 0.0
    %1460 = vmatprep.subr.mxu0 0.0
    %1461 = vmatpush1.msra.mxu0 0.0
    %1462 = vmatprep.subr.mxu0 0.0
    %1463 = vmatpush1.msra.mxu0 0.0
    %1464 = vmatprep.subr.mxu0 0.0
    %1465 = vmatpush1.msra.mxu0 0.0
    %1466 = vmatprep.subr.mxu0 0.0
    %1467 = vmatpush1.msra.mxu0 0.0
    %1468 = vmatprep.subr.mxu0 0.0
    %1469 = vmatpush1.msra.mxu0 0.0
    %1470 = vmatprep.subr.mxu0 0.0
    %1471 = vmatpush1.msra.mxu0 0.0
    %1472 = vmatprep.subr.mxu0 0.0
    %1473 = vmatpush1.msra.mxu0 0.0
    %1474 = vmatprep.subr.mxu0 0.0
    %1475 = vmatpush1.msra.mxu0 0.0
    %1476 = vmatprep.subr.mxu0 0.0
    %1477 = vmatpush1.msra.mxu0 0.0
    %1478 = vmatprep.subr.mxu0 0.0
    %1479 = vmatpush1.msra.mxu0 0.0
    %1480 = vmatprep.subr.mxu0 0.0
    %1481 = vmatpush1.msra.mxu0 0.0
    %1482 = vmatprep.subr.mxu0 0.0
    %1483 = vmatpush1.msra.mxu0 0.0
    %1484 = vmatprep.subr.mxu0 0.0
    %1485 = vmatpush1.msra.mxu0 0.0
    %1486 = vmatprep.subr.mxu0 0.0
    %1487 = vmatpush1.msra.mxu0 0.0
    %1488 = vmatprep.subr.mxu0 0.0
    %1489 = vmatpush1.msra.mxu0 0.0
    %1490 = vmatprep.subr.mxu0 0.0
    %1491 = vmatpush1.msra.mxu0 0.0
    %1492 = vmatprep.subr.mxu0 0.0
    %1493 = vmatpush1.msra.mxu0 0.0
    %1494 = vmatprep.subr.mxu0 0.0
    %1495 = vmatpush1.msra.mxu0 0.0
    %1496 = vmatprep.mubr.f32.mxu0 0.0
    %1497 = vmatmul.mubr.f32.gmra.mrb[0].mxu0 %v1409
    %v1498 = vpop.f32.mrb[0].mxu0
    %v1499 = vadd.f32 0.0, %v1498
    %v1500 = vpop.f32.mrb[0].mxu0
    %1501 = vmatprep.mubr.f32.mxu0 0.0
    %1502 = vmatmul.mubr.f32.gmra.mrb[0].mxu0 %v1412
    %v1503 = vpop.f32.mrb[0].mxu0
    %v1504 = vadd.f32 0.0, %v1503
    %v1505 = vpop.f32.mrb[0].mxu0
    %1506 = vmatprep.mubr.f32.mxu0 0.0
    %1507 = vmatmul.mubr.f32.gmra.mrb[0].mxu0 %v1415
    %v1508 = vpop.f32.mrb[0].mxu0
    %v1509 = vadd.f32 0.0, %v1508
    %v1510 = vpop.f32.mrb[0].mxu0
    %1511 = vmatprep.mubr.f32.mxu0 0.0
    %1512 = vmatmul.mubr.f32.gmra.mrb[0].mxu0 %v1418
    %v1513 = vpop.f32.mrb[0].mxu0
    %v1514 = vadd.f32 0.0, %v1513
    %v1515 = vpop.f32.mrb[0].mxu0
    %1516 = vmatprep.mubr.f32.mxu0 0.0
    %1517 = vmatmul.mubr.f32.gmra.mrb[0].mxu0 %v1421
    %v1518 = vpop.f32.mrb[0].mxu0
    %v1519 = vadd.f32 0.0, %v1518
    %v1520 = vpop.f32.mrb[0].mxu0
    %1521 = vmatprep.mubr.f32.mxu0 0.0
    %1522 = vmatmul.mubr.f32.gmra.mrb[0].mxu0 %v1424
    %v1523 = vpop.f32.mrb[0].mxu0
    %v1524 = vadd.f32 0.0, %v1523
    %v1525 = vpop.f32.mrb[0].mxu0
    %1526 = vmatprep.mubr.f32.mxu0 0.0
    %1527 = vmatmul.mubr.f32.gmra.mrb[0].mxu0 %v1427
    %v1528 = vpop.f32.mrb[0].mxu0
    %v1529 = vadd.f32 0.0, %v1528
    %v1530 = vpop.f32.mrb[0].mxu0
    %1531 = vmatprep.mubr.f32.mxu0 0.0
    %1532 = vmatmul.mubr.f32.gmra.mrb[0].mxu0 %v1430
    %v1533 = vpop.f32.mrb[0].mxu0
    %v1534 = vadd.f32 0.0, %v1533
    %v1535 = vpop.f32.mrb[0].mxu0
    %1536 = vdwg.mxu0
    %v1537 = vadd.f32 %v1387, %v1499
    %v1538 = vadd.f32 %v1388, %v1504
    %v1539 = vadd.f32 %v1389, %v1509
    %v1540 = vadd.f32 %v1390, %v1514
    %v1541 = vadd.f32 %v1391, %v1519
    %v1542 = vadd.f32 %v1392, %v1524
    %v1543 = vadd.f32 %v1393, %v1529
    %v1544 = vadd.f32 %v1394, %v1534
    %v1545 = vld [vmem:[%s2] sm:$0x1]
    %v1547 = vlaneseq
    %v1548 = vshrl.u32 %v1547, 7
    %v1549 = vsub.s32 0, %v1548
    %v1550 = vrot.slane %v1545, %v1549
    %v1552 = vadd.f32 %v1537, %v1550
    %v1553 = vadd.f32 %v1538, %v1550
    %v1554 = vadd.f32 %v1539, %v1550
    %v1555 = vadd.f32 %v1540, %v1550
    %v1556 = vadd.f32 %v1541, %v1550
    %v1557 = vadd.f32 %v1542, %v1550
    %v1558 = vadd.f32 %v1543, %v1550
    %v1559 = vadd.f32 %v1544, %v1550
    %v1560 = vmax.f32 %v1552, 0.0
    %v1561 = vmax.f32 %v1553, 0.0
    %v1562 = vmax.f32 %v1554, 0.0
    %v1563 = vmax.f32 %v1555, 0.0
    %v1564 = vmax.f32 %v1556, 0.0
    %v1565 = vmax.f32 %v1557, 0.0
    %v1566 = vmax.f32 %v1558, 0.0
    %v1567 = vmax.f32 %v1559, 0.0
    %vm1568 = vcmask 523264
    %1569 = vst.msk [vmem:[#allocation2] sm:$0xff] %vm1568, 0.0
    %1570 = vst.msk [vmem:[#allocation2 + $0x8] sm:$0xff] %vm1568, 0.0
    %s1571 = scalar_lea.vmem [#allocation2], 80
    %1572 = vst.msk [vmem:[%s1571] sm:$0xff] %vm1568, 0.0
    %1573 = vst.msk [vmem:[%s1571 + $0x8] sm:$0xff] %vm1568, 0.0
    %s1574 = scalar_lea.vmem [#allocation2], 16
    %vm1575 = vcmask 130048
    %1576 = vst.msk [vmem:[%s1574] sm:$0xff] %vm1575, 0.0
    %1577 = vst.msk [vmem:[%s1574 + $0x8] sm:$0xff] %vm1575, 0.0
    %1578 = vst.msk [vmem:[%s1574 + $0x10] sm:$0xff] %vm1575, 0.0
    %1579 = vst.msk [vmem:[%s1574 + $0x18] sm:$0xff] %vm1575, 0.0
    %1580 = vst.msk [vmem:[%s1574 + $0x20] sm:$0xff] %vm1575, 0.0
    %1581 = vst.msk [vmem:[%s1574 + $0x28] sm:$0xff] %vm1575, 0.0
    %1582 = vst.msk [vmem:[%s1574 + $0x30] sm:$0xff] %vm1575, 0.0
    %1583 = vst.msk [vmem:[%s1574 + $0x38] sm:$0xff] %vm1575, 0.0
    %vm1584 = vcmask 523648
    %1585 = vst.msk [vmem:[%s1574] sm:$0xff] %vm1584, 0.0
    %1586 = vst.msk [vmem:[%s1574 + $0x8] sm:$0xff] %vm1584, 0.0
    %1587 = vst.msk [vmem:[%s1574 + $0x10] sm:$0xff] %vm1584, 0.0
    %1588 = vst.msk [vmem:[%s1574 + $0x18] sm:$0xff] %vm1584, 0.0
    %1589 = vst.msk [vmem:[%s1574 + $0x20] sm:$0xff] %vm1584, 0.0
    %1590 = vst.msk [vmem:[%s1574 + $0x28] sm:$0xff] %vm1584, 0.0
    %1591 = vst.msk [vmem:[%s1574 + $0x30] sm:$0xff] %vm1584, 0.0
    %1592 = vst.msk [vmem:[%s1574 + $0x38] sm:$0xff] %vm1584, 0.0
    %1601 = vrot.lane.b32.xlu0 %v1560, 16
    %v1602 = vpop.permute.xlu0 %1601
    %1603 = vrot.lane.b32.xlu0 %v1561, 16
    %v1604 = vpop.permute.xlu0 %1603
    %1605 = vrot.lane.b32.xlu0 %v1562, 16
    %v1606 = vpop.permute.xlu0 %1605
    %1607 = vrot.lane.b32.xlu0 %v1563, 16
    %v1608 = vpop.permute.xlu0 %1607
    %1609 = vrot.lane.b32.xlu0 %v1564, 16
    %v1610 = vpop.permute.xlu0 %1609
    %1611 = vrot.lane.b32.xlu0 %v1565, 16
    %v1612 = vpop.permute.xlu0 %1611
    %1613 = vrot.lane.b32.xlu0 %v1566, 16
    %v1614 = vpop.permute.xlu0 %1613
    %1615 = vrot.lane.b32.xlu0 %v1567, 16
    %v1616 = vpop.permute.xlu0 %1615
    %vm1625 = vcmask 392320
    %1626 = vst.msk [vmem:[%s1574] sm:$0xff] %vm1625, %v1602
    %1627 = vst.msk [vmem:[%s1574 + $0x8] sm:$0xff] %vm1625, %v1604
    %1628 = vst.msk [vmem:[%s1574 + $0x10] sm:$0xff] %vm1625, %v1606
    %1629 = vst.msk [vmem:[%s1574 + $0x18] sm:$0xff] %vm1625, %v1608
    %1630 = vst.msk [vmem:[%s1574 + $0x20] sm:$0xff] %vm1625, %v1610
    %1631 = vst.msk [vmem:[%s1574 + $0x28] sm:$0xff] %vm1625, %v1612
    %1632 = vst.msk [vmem:[%s1574 + $0x30] sm:$0xff] %vm1625, %v1614
    %1633 = vst.msk [vmem:[%s1574 + $0x38] sm:$0xff] %vm1625, %v1616
    %v1634 = vld [vmem:[#allocation2] sm:$0xff]
    %v1635 = vld [vmem:[#allocation2 + $0x8] sm:$0xff]
    %v1636 = vld [vmem:[#allocation2 + $0x10] sm:$0xff]
    %v1637 = vld [vmem:[#allocation2 + $0x18] sm:$0xff]
    %v1638 = vld [vmem:[#allocation2 + $0x20] sm:$0xff]
    %v1639 = vld [vmem:[#allocation2 + $0x28] sm:$0xff]
    %v1640 = vld [vmem:[#allocation2 + $0x30] sm:$0xff]
    %v1641 = vld [vmem:[#allocation2 + $0x38] sm:$0xff]
    %v1642 = vld [vmem:[#allocation2 + $0x40] sm:$0xff]
    %v1643 = vld [vmem:[#allocation2 + $0x48] sm:$0xff]
    %v1644 = vld [vmem:[#allocation8] sm:$0xff]
    %v1645 = vld [vmem:[#allocation8 + $0x8] sm:$0xff]
    %v1646 = vld [vmem:[#allocation8 + $0x10] sm:$0xff]
    %v1647 = vld [vmem:[#allocation8 + $0x18] sm:$0xff]
    %v1648 = vld [vmem:[#allocation8 + $0x20] sm:$0xff]
    %v1649 = vld [vmem:[#allocation8 + $0x28] sm:$0xff]
    %v1650 = vld [vmem:[#allocation8 + $0x30] sm:$0xff]
    %v1651 = vld [vmem:[#allocation8 + $0x38] sm:$0xff]
    %s1652 = scalar_lea.vmem [#allocation2], 8
    %v1653 = vld [vmem:[%s1652] sm:$0xff]
    %v1654 = vld [vmem:[%s1652 + $0x8] sm:$0xff]
    %v1655 = vld [vmem:[%s1652 + $0x10] sm:$0xff]
    %v1656 = vld [vmem:[%s1652 + $0x18] sm:$0xff]
    %v1657 = vld [vmem:[%s1652 + $0x20] sm:$0xff]
    %v1658 = vld [vmem:[%s1652 + $0x28] sm:$0xff]
    %v1659 = vld [vmem:[%s1652 + $0x30] sm:$0xff]
    %v1660 = vld [vmem:[%s1652 + $0x38] sm:$0xff]
    %v1661 = vld [vmem:[%s1652 + $0x40] sm:$0xff]
    %v1662 = vld [vmem:[%s1652 + $0x48] sm:$0xff]
    %s1663 = scalar_lea.vmem [#allocation8], 64
    %v1664 = vld [vmem:[%s1663] sm:$0xff]
    %v1665 = vld [vmem:[%s1663 + $0x8] sm:$0xff]
    %v1666 = vld [vmem:[%s1663 + $0x10] sm:$0xff]
    %v1667 = vld [vmem:[%s1663 + $0x18] sm:$0xff]
    %v1668 = vld [vmem:[%s1663 + $0x20] sm:$0xff]
    %v1669 = vld [vmem:[%s1663 + $0x28] sm:$0xff]
    %v1670 = vld [vmem:[%s1663 + $0x30] sm:$0xff]
    %v1671 = vld [vmem:[%s1663 + $0x38] sm:$0xff]
    %v1673 = vsel %vm1568, %v1653, 0
    %v1676 = vsel %vm1568, %v1654, 0
    %v1679 = vsel %vm1568, %v1655, 0
    %v1682 = vsel %vm1568, %v1656, 0
    %v1685 = vsel %vm1568, %v1657, 0
    %v1688 = vsel %vm1568, %v1658, 0
    %v1691 = vsel %vm1568, %v1659, 0
    %v1694 = vsel %vm1568, %v1660, 0
    %v1697 = vsel %vm1568, %v1661, 0
    %v1700 = vsel %vm1568, %v1662, 0
    %1702 = vmatprep.subr.mxu0 0.0
    %1703 = vmatpush1.msra.mxu0 %v1664
    %1704 = vmatprep.subr.mxu0 0.0
    %1705 = vmatpush1.msra.mxu0 %v1665
    %1706 = vmatprep.subr.mxu0 0.0
    %1707 = vmatpush1.msra.mxu0 %v1666
    %1708 = vmatprep.subr.mxu0 0.0
    %1709 = vmatpush1.msra.mxu0 %v1667
    %1710 = vmatprep.subr.mxu0 0.0
    %1711 = vmatpush1.msra.mxu0 %v1668
    %1712 = vmatprep.subr.mxu0 0.0
    %1713 = vmatpush1.msra.mxu0 %v1669
    %1714 = vmatprep.subr.mxu0 0.0
    %1715 = vmatpush1.msra.mxu0 %v1670
    %1716 = vmatprep.subr.mxu0 0.0
    %1717 = vmatpush1.msra.mxu0 %v1671
    %1718 = vmatprep.subr.mxu0 0.0
    %1719 = vmatpush1.msra.mxu0 0.0
    %1720 = vmatprep.subr.mxu0 0.0
    %1721 = vmatpush1.msra.mxu0 0.0
    %1722 = vmatprep.subr.mxu0 0.0
    %1723 = vmatpush1.msra.mxu0 0.0
    %1724 = vmatprep.subr.mxu0 0.0
    %1725 = vmatpush1.msra.mxu0 0.0
    %1726 = vmatprep.subr.mxu0 0.0
    %1727 = vmatpush1.msra.mxu0 0.0
    %1728 = vmatprep.subr.mxu0 0.0
    %1729 = vmatpush1.msra.mxu0 0.0
    %1730 = vmatprep.subr.mxu0 0.0
    %1731 = vmatpush1.msra.mxu0 0.0
    %1732 = vmatprep.subr.mxu0 0.0
    %1733 = vmatpush1.msra.mxu0 0.0
    %1734 = vmatprep.subr.mxu0 0.0
    %1735 = vmatpush1.msra.mxu0 0.0
    %1736 = vmatprep.subr.mxu0 0.0
    %1737 = vmatpush1.msra.mxu0 0.0
    %1738 = vmatprep.subr.mxu0 0.0
    %1739 = vmatpush1.msra.mxu0 0.0
    %1740 = vmatprep.subr.mxu0 0.0
    %1741 = vmatpush1.msra.mxu0 0.0
    %1742 = vmatprep.subr.mxu0 0.0
    %1743 = vmatpush1.msra.mxu0 0.0
    %1744 = vmatprep.subr.mxu0 0.0
    %1745 = vmatpush1.msra.mxu0 0.0
    %1746 = vmatprep.subr.mxu0 0.0
    %1747 = vmatpush1.msra.mxu0 0.0
    %1748 = vmatprep.subr.mxu0 0.0
    %1749 = vmatpush1.msra.mxu0 0.0
    %1750 = vmatprep.subr.mxu0 0.0
    %1751 = vmatpush1.msra.mxu0 0.0
    %1752 = vmatprep.subr.mxu0 0.0
    %1753 = vmatpush1.msra.mxu0 0.0
    %1754 = vmatprep.subr.mxu0 0.0
    %1755 = vmatpush1.msra.mxu0 0.0
    %1756 = vmatprep.subr.mxu0 0.0
    %1757 = vmatpush1.msra.mxu0 0.0
    %1758 = vmatprep.subr.mxu0 0.0
    %1759 = vmatpush1.msra.mxu0 0.0
    %1760 = vmatprep.subr.mxu0 0.0
    %1761 = vmatpush1.msra.mxu0 0.0
    %1762 = vmatprep.subr.mxu0 0.0
    %1763 = vmatpush1.msra.mxu0 0.0
    %1764 = vmatprep.subr.mxu0 0.0
    %1765 = vmatpush1.msra.mxu0 0.0
    %1766 = vmatprep.mubr.f32.mxu0 0.0
    %1767 = vmatmul.mubr.f32.gmra.mrb[0].mxu0 %v1673
    %v1768 = vpop.f32.mrb[0].mxu0
    %v1769 = vadd.f32 0.0, %v1768
    %v1770 = vpop.f32.mrb[0].mxu0
    %1771 = vmatprep.mubr.f32.mxu0 0.0
    %1772 = vmatmul.mubr.f32.gmra.mrb[0].mxu0 %v1676
    %v1773 = vpop.f32.mrb[0].mxu0
    %v1774 = vadd.f32 0.0, %v1773
    %v1775 = vpop.f32.mrb[0].mxu0
    %1776 = vmatprep.mubr.f32.mxu0 0.0
    %1777 = vmatmul.mubr.f32.gmra.mrb[0].mxu0 %v1679
    %v1778 = vpop.f32.mrb[0].mxu0
    %v1779 = vadd.f32 0.0, %v1778
    %v1780 = vpop.f32.mrb[0].mxu0
    %1781 = vmatprep.mubr.f32.mxu0 0.0
    %1782 = vmatmul.mubr.f32.gmra.mrb[0].mxu0 %v1682
    %v1783 = vpop.f32.mrb[0].mxu0
    %v1784 = vadd.f32 0.0, %v1783
    %v1785 = vpop.f32.mrb[0].mxu0
    %1786 = vmatprep.mubr.f32.mxu0 0.0
    %1787 = vmatmul.mubr.f32.gmra.mrb[0].mxu0 %v1685
    %v1788 = vpop.f32.mrb[0].mxu0
    %v1789 = vadd.f32 0.0, %v1788
    %v1790 = vpop.f32.mrb[0].mxu0
    %1791 = vmatprep.mubr.f32.mxu0 0.0
    %1792 = vmatmul.mubr.f32.gmra.mrb[0].mxu0 %v1688
    %v1793 = vpop.f32.mrb[0].mxu0
    %v1794 = vadd.f32 0.0, %v1793
    %v1795 = vpop.f32.mrb[0].mxu0
    %1796 = vmatprep.mubr.f32.mxu0 0.0
    %1797 = vmatmul.mubr.f32.gmra.mrb[0].mxu0 %v1691
    %v1798 = vpop.f32.mrb[0].mxu0
    %v1799 = vadd.f32 0.0, %v1798
    %v1800 = vpop.f32.mrb[0].mxu0
    %1801 = vmatprep.mubr.f32.mxu0 0.0
    %1802 = vmatmul.mubr.f32.gmra.mrb[0].mxu0 %v1694
    %v1803 = vpop.f32.mrb[0].mxu0
    %v1804 = vadd.f32 0.0, %v1803
    %v1805 = vpop.f32.mrb[0].mxu0
    %1806 = vmatprep.mubr.f32.mxu0 0.0
    %1807 = vmatmul.mubr.f32.gmra.mrb[0].mxu0 %v1697
    %v1808 = vpop.f32.mrb[0].mxu0
    %v1809 = vadd.f32 0.0, %v1808
    %v1810 = vpop.f32.mrb[0].mxu0
    %1811 = vmatprep.mubr.f32.mxu0 0.0
    %1812 = vmatmul.mubr.f32.gmra.mrb[0].mxu0 %v1700
    %v1813 = vpop.f32.mrb[0].mxu0
    %v1814 = vadd.f32 0.0, %v1813
    %v1815 = vpop.f32.mrb[0].mxu0
    %1816 = vdwg.mxu0
    %v1818 = vsel %vm1568, %v1634, 0
    %v1821 = vsel %vm1568, %v1635, 0
    %v1824 = vsel %vm1568, %v1636, 0
    %v1827 = vsel %vm1568, %v1637, 0
    %v1830 = vsel %vm1568, %v1638, 0
    %v1833 = vsel %vm1568, %v1639, 0
    %v1836 = vsel %vm1568, %v1640, 0
    %v1839 = vsel %vm1568, %v1641, 0
    %v1842 = vsel %vm1568, %v1642, 0
    %v1845 = vsel %vm1568, %v1643, 0
    %1847 = vmatprep.subr.mxu0 0.0
    %1848 = vmatpush1.msra.mxu0 %v1644
    %1849 = vmatprep.subr.mxu0 0.0
    %1850 = vmatpush1.msra.mxu0 %v1645
    %1851 = vmatprep.subr.mxu0 0.0
    %1852 = vmatpush1.msra.mxu0 %v1646
    %1853 = vmatprep.subr.mxu0 0.0
    %1854 = vmatpush1.msra.mxu0 %v1647
    %1855 = vmatprep.subr.mxu0 0.0
    %1856 = vmatpush1.msra.mxu0 %v1648
    %1857 = vmatprep.subr.mxu0 0.0
    %1858 = vmatpush1.msra.mxu0 %v1649
    %1859 = vmatprep.subr.mxu0 0.0
    %1860 = vmatpush1.msra.mxu0 %v1650
    %1861 = vmatprep.subr.mxu0 0.0
    %1862 = vmatpush1.msra.mxu0 %v1651
    %1863 = vmatprep.subr.mxu0 0.0
    %1864 = vmatpush1.msra.mxu0 0.0
    %1865 = vmatprep.subr.mxu0 0.0
    %1866 = vmatpush1.msra.mxu0 0.0
    %1867 = vmatprep.subr.mxu0 0.0
    %1868 = vmatpush1.msra.mxu0 0.0
    %1869 = vmatprep.subr.mxu0 0.0
    %1870 = vmatpush1.msra.mxu0 0.0
    %1871 = vmatprep.subr.mxu0 0.0
    %1872 = vmatpush1.msra.mxu0 0.0
    %1873 = vmatprep.subr.mxu0 0.0
    %1874 = vmatpush1.msra.mxu0 0.0
    %1875 = vmatprep.subr.mxu0 0.0
    %1876 = vmatpush1.msra.mxu0 0.0
    %1877 = vmatprep.subr.mxu0 0.0
    %1878 = vmatpush1.msra.mxu0 0.0
    %1879 = vmatprep.subr.mxu0 0.0
    %1880 = vmatpush1.msra.mxu0 0.0
    %1881 = vmatprep.subr.mxu0 0.0
    %1882 = vmatpush1.msra.mxu0 0.0
    %1883 = vmatprep.subr.mxu0 0.0
    %1884 = vmatpush1.msra.mxu0 0.0
    %1885 = vmatprep.subr.mxu0 0.0
    %1886 = vmatpush1.msra.mxu0 0.0
    %1887 = vmatprep.subr.mxu0 0.0
    %1888 = vmatpush1.msra.mxu0 0.0
    %1889 = vmatprep.subr.mxu0 0.0
    %1890 = vmatpush1.msra.mxu0 0.0
    %1891 = vmatprep.subr.mxu0 0.0
    %1892 = vmatpush1.msra.mxu0 0.0
    %1893 = vmatprep.subr.mxu0 0.0
    %1894 = vmatpush1.msra.mxu0 0.0
    %1895 = vmatprep.subr.mxu0 0.0
    %1896 = vmatpush1.msra.mxu0 0.0
    %1897 = vmatprep.subr.mxu0 0.0
    %1898 = vmatpush1.msra.mxu0 0.0
    %1899 = vmatprep.subr.mxu0 0.0
    %1900 = vmatpush1.msra.mxu0 0.0
    %1901 = vmatprep.subr.mxu0 0.0
    %1902 = vmatpush1.msra.mxu0 0.0
    %1903 = vmatprep.subr.mxu0 0.0
    %1904 = vmatpush1.msra.mxu0 0.0
    %1905 = vmatprep.subr.mxu0 0.0
    %1906 = vmatpush1.msra.mxu0 0.0
    %1907 = vmatprep.subr.mxu0 0.0
    %1908 = vmatpush1.msra.mxu0 0.0
    %1909 = vmatprep.subr.mxu0 0.0
    %1910 = vmatpush1.msra.mxu0 0.0
    %1911 = vmatprep.mubr.f32.mxu0 0.0
    %1912 = vmatmul.mubr.f32.gmra.mrb[0].mxu0 %v1818
    %v1913 = vpop.f32.mrb[0].mxu0
    %v1914 = vadd.f32 %v1769, %v1913
    %v1915 = vpop.f32.mrb[0].mxu0
    %1916 = vmatprep.mubr.f32.mxu0 0.0
    %1917 = vmatmul.mubr.f32.gmra.mrb[0].mxu0 %v1821
    %v1918 = vpop.f32.mrb[0].mxu0
    %v1919 = vadd.f32 %v1774, %v1918
    %v1920 = vpop.f32.mrb[0].mxu0
    %1921 = vmatprep.mubr.f32.mxu0 0.0
    %1922 = vmatmul.mubr.f32.gmra.mrb[0].mxu0 %v1824
    %v1923 = vpop.f32.mrb[0].mxu0
    %v1924 = vadd.f32 %v1779, %v1923
    %v1925 = vpop.f32.mrb[0].mxu0
    %1926 = vmatprep.mubr.f32.mxu0 0.0
    %1927 = vmatmul.mubr.f32.gmra.mrb[0].mxu0 %v1827
    %v1928 = vpop.f32.mrb[0].mxu0
    %v1929 = vadd.f32 %v1784, %v1928
    %v1930 = vpop.f32.mrb[0].mxu0
    %1931 = vmatprep.mubr.f32.mxu0 0.0
    %1932 = vmatmul.mubr.f32.gmra.mrb[0].mxu0 %v1830
    %v1933 = vpop.f32.mrb[0].mxu0
    %v1934 = vadd.f32 %v1789, %v1933
    %v1935 = vpop.f32.mrb[0].mxu0
    %1936 = vmatprep.mubr.f32.mxu0 0.0
    %1937 = vmatmul.mubr.f32.gmra.mrb[0].mxu0 %v1833
    %v1938 = vpop.f32.mrb[0].mxu0
    %v1939 = vadd.f32 %v1794, %v1938
    %v1940 = vpop.f32.mrb[0].mxu0
    %1941 = vmatprep.mubr.f32.mxu0 0.0
    %1942 = vmatmul.mubr.f32.gmra.mrb[0].mxu0 %v1836
    %v1943 = vpop.f32.mrb[0].mxu0
    %v1944 = vadd.f32 %v1799, %v1943
    %v1945 = vpop.f32.mrb[0].mxu0
    %1946 = vmatprep.mubr.f32.mxu0 0.0
    %1947 = vmatmul.mubr.f32.gmra.mrb[0].mxu0 %v1839
    %v1948 = vpop.f32.mrb[0].mxu0
    %v1949 = vadd.f32 %v1804, %v1948
    %v1950 = vpop.f32.mrb[0].mxu0
    %1951 = vmatprep.mubr.f32.mxu0 0.0
    %1952 = vmatmul.mubr.f32.gmra.mrb[0].mxu0 %v1842
    %v1953 = vpop.f32.mrb[0].mxu0
    %v1954 = vadd.f32 %v1809, %v1953
    %v1955 = vpop.f32.mrb[0].mxu0
    %1956 = vmatprep.mubr.f32.mxu0 0.0
    %1957 = vmatmul.mubr.f32.gmra.mrb[0].mxu0 %v1845
    %v1958 = vpop.f32.mrb[0].mxu0
    %v1959 = vadd.f32 %v1814, %v1958
    %v1960 = vpop.f32.mrb[0].mxu0
    %1961 = vdwg.mxu0
    %v1962 = vld [vmem:[%s1574] sm:$0xff]
    %v1963 = vld [vmem:[%s1574 + $0x8] sm:$0xff]
    %v1964 = vld [vmem:[%s1574 + $0x10] sm:$0xff]
    %v1965 = vld [vmem:[%s1574 + $0x18] sm:$0xff]
    %v1966 = vld [vmem:[%s1574 + $0x20] sm:$0xff]
    %v1967 = vld [vmem:[%s1574 + $0x28] sm:$0xff]
    %v1968 = vld [vmem:[%s1574 + $0x30] sm:$0xff]
    %v1969 = vld [vmem:[%s1574 + $0x38] sm:$0xff]
    %v1970 = vld [vmem:[%s1574 + $0x40] sm:$0xff]
    %v1971 = vld [vmem:[%s1574 + $0x48] sm:$0xff]
    %s1972 = scalar_lea.vmem [#allocation8], 128
    %v1973 = vld [vmem:[%s1972] sm:$0xff]
    %v1974 = vld [vmem:[%s1972 + $0x8] sm:$0xff]
    %v1975 = vld [vmem:[%s1972 + $0x10] sm:$0xff]
    %v1976 = vld [vmem:[%s1972 + $0x18] sm:$0xff]
    %v1977 = vld [vmem:[%s1972 + $0x20] sm:$0xff]
    %v1978 = vld [vmem:[%s1972 + $0x28] sm:$0xff]
    %v1979 = vld [vmem:[%s1972 + $0x30] sm:$0xff]
    %v1980 = vld [vmem:[%s1972 + $0x38] sm:$0xff]
    %v1982 = vsel %vm1568, %v1962, 0
    %v1985 = vsel %vm1568, %v1963, 0
    %v1988 = vsel %vm1568, %v1964, 0
    %v1991 = vsel %vm1568, %v1965, 0
    %v1994 = vsel %vm1568, %v1966, 0
    %v1997 = vsel %vm1568, %v1967, 0
    %v2000 = vsel %vm1568, %v1968, 0
    %v2003 = vsel %vm1568, %v1969, 0
    %v2006 = vsel %vm1568, %v1970, 0
    %v2009 = vsel %vm1568, %v1971, 0
    %2011 = vmatprep.subr.mxu0 0.0
    %2012 = vmatpush1.msra.mxu0 %v1973
    %2013 = vmatprep.subr.mxu0 0.0
    %2014 = vmatpush1.msra.mxu0 %v1974
    %2015 = vmatprep.subr.mxu0 0.0
    %2016 = vmatpush1.msra.mxu0 %v1975
    %2017 = vmatprep.subr.mxu0 0.0
    %2018 = vmatpush1.msra.mxu0 %v1976
    %2019 = vmatprep.subr.mxu0 0.0
    %2020 = vmatpush1.msra.mxu0 %v1977
    %2021 = vmatprep.subr.mxu0 0.0
    %2022 = vmatpush1.msra.mxu0 %v1978
    %2023 = vmatprep.subr.mxu0 0.0
    %2024 = vmatpush1.msra.mxu0 %v1979
    %2025 = vmatprep.subr.mxu0 0.0
    %2026 = vmatpush1.msra.mxu0 %v1980
    %2027 = vmatprep.subr.mxu0 0.0
    %2028 = vmatpush1.msra.mxu0 0.0
    %2029 = vmatprep.subr.mxu0 0.0
    %2030 = vmatpush1.msra.mxu0 0.0
    %2031 = vmatprep.subr.mxu0 0.0
    %2032 = vmatpush1.msra.mxu0 0.0
    %2033 = vmatprep.subr.mxu0 0.0
    %2034 = vmatpush1.msra.mxu0 0.0
    %2035 = vmatprep.subr.mxu0 0.0
    %2036 = vmatpush1.msra.mxu0 0.0
    %2037 = vmatprep.subr.mxu0 0.0
    %2038 = vmatpush1.msra.mxu0 0.0
    %2039 = vmatprep.subr.mxu0 0.0
    %2040 = vmatpush1.msra.mxu0 0.0
    %2041 = vmatprep.subr.mxu0 0.0
    %2042 = vmatpush1.msra.mxu0 0.0
    %2043 = vmatprep.subr.mxu0 0.0
    %2044 = vmatpush1.msra.mxu0 0.0
    %2045 = vmatprep.subr.mxu0 0.0
    %2046 = vmatpush1.msra.mxu0 0.0
    %2047 = vmatprep.subr.mxu0 0.0
    %2048 = vmatpush1.msra.mxu0 0.0
    %2049 = vmatprep.subr.mxu0 0.0
    %2050 = vmatpush1.msra.mxu0 0.0
    %2051 = vmatprep.subr.mxu0 0.0
    %2052 = vmatpush1.msra.mxu0 0.0
    %2053 = vmatprep.subr.mxu0 0.0
    %2054 = vmatpush1.msra.mxu0 0.0
    %2055 = vmatprep.subr.mxu0 0.0
    %2056 = vmatpush1.msra.mxu0 0.0
    %2057 = vmatprep.subr.mxu0 0.0
    %2058 = vmatpush1.msra.mxu0 0.0
    %2059 = vmatprep.subr.mxu0 0.0
    %2060 = vmatpush1.msra.mxu0 0.0
    %2061 = vmatprep.subr.mxu0 0.0
    %2062 = vmatpush1.msra.mxu0 0.0
    %2063 = vmatprep.subr.mxu0 0.0
    %2064 = vmatpush1.msra.mxu0 0.0
    %2065 = vmatprep.subr.mxu0 0.0
    %2066 = vmatpush1.msra.mxu0 0.0
    %2067 = vmatprep.subr.mxu0 0.0
    %2068 = vmatpush1.msra.mxu0 0.0
    %2069 = vmatprep.subr.mxu0 0.0
    %2070 = vmatpush1.msra.mxu0 0.0
    %2071 = vmatprep.subr.mxu0 0.0
    %2072 = vmatpush1.msra.mxu0 0.0
    %2073 = vmatprep.subr.mxu0 0.0
    %2074 = vmatpush1.msra.mxu0 0.0
    %2075 = vmatprep.mubr.f32.mxu0 0.0
    %2076 = vmatmul.mubr.f32.gmra.mrb[0].mxu0 %v1982
    %v2077 = vpop.f32.mrb[0].mxu0
    %v2078 = vadd.f32 0.0, %v2077
    %v2079 = vpop.f32.mrb[0].mxu0
    %2080 = vmatprep.mubr.f32.mxu0 0.0
    %2081 = vmatmul.mubr.f32.gmra.mrb[0].mxu0 %v1985
    %v2082 = vpop.f32.mrb[0].mxu0
    %v2083 = vadd.f32 0.0, %v2082
    %v2084 = vpop.f32.mrb[0].mxu0
    %2085 = vmatprep.mubr.f32.mxu0 0.0
    %2086 = vmatmul.mubr.f32.gmra.mrb[0].mxu0 %v1988
    %v2087 = vpop.f32.mrb[0].mxu0
    %v2088 = vadd.f32 0.0, %v2087
    %v2089 = vpop.f32.mrb[0].mxu0
    %2090 = vmatprep.mubr.f32.mxu0 0.0
    %2091 = vmatmul.mubr.f32.gmra.mrb[0].mxu0 %v1991
    %v2092 = vpop.f32.mrb[0].mxu0
    %v2093 = vadd.f32 0.0, %v2092
    %v2094 = vpop.f32.mrb[0].mxu0
    %2095 = vmatprep.mubr.f32.mxu0 0.0
    %2096 = vmatmul.mubr.f32.gmra.mrb[0].mxu0 %v1994
    %v2097 = vpop.f32.mrb[0].mxu0
    %v2098 = vadd.f32 0.0, %v2097
    %v2099 = vpop.f32.mrb[0].mxu0
    %2100 = vmatprep.mubr.f32.mxu0 0.0
    %2101 = vmatmul.mubr.f32.gmra.mrb[0].mxu0 %v1997
    %v2102 = vpop.f32.mrb[0].mxu0
    %v2103 = vadd.f32 0.0, %v2102
    %v2104 = vpop.f32.mrb[0].mxu0
    %2105 = vmatprep.mubr.f32.mxu0 0.0
    %2106 = vmatmul.mubr.f32.gmra.mrb[0].mxu0 %v2000
    %v2107 = vpop.f32.mrb[0].mxu0
    %v2108 = vadd.f32 0.0, %v2107
    %v2109 = vpop.f32.mrb[0].mxu0
    %2110 = vmatprep.mubr.f32.mxu0 0.0
    %2111 = vmatmul.mubr.f32.gmra.mrb[0].mxu0 %v2003
    %v2112 = vpop.f32.mrb[0].mxu0
    %v2113 = vadd.f32 0.0, %v2112
    %v2114 = vpop.f32.mrb[0].mxu0
    %2115 = vmatprep.mubr.f32.mxu0 0.0
    %2116 = vmatmul.mubr.f32.gmra.mrb[0].mxu0 %v2006
    %v2117 = vpop.f32.mrb[0].mxu0
    %v2118 = vadd.f32 0.0, %v2117
    %v2119 = vpop.f32.mrb[0].mxu0
    %2120 = vmatprep.mubr.f32.mxu0 0.0
    %2121 = vmatmul.mubr.f32.gmra.mrb[0].mxu0 %v2009
    %v2122 = vpop.f32.mrb[0].mxu0
    %v2123 = vadd.f32 0.0, %v2122
    %v2124 = vpop.f32.mrb[0].mxu0
    %2125 = vdwg.mxu0
    %v2126 = vadd.f32 %v1914, %v2078
    %v2127 = vadd.f32 %v1919, %v2083
    %v2128 = vadd.f32 %v1924, %v2088
    %v2129 = vadd.f32 %v1929, %v2093
    %v2130 = vadd.f32 %v1934, %v2098
    %v2131 = vadd.f32 %v1939, %v2103
    %v2132 = vadd.f32 %v1944, %v2108
    %v2133 = vadd.f32 %v1949, %v2113
    %v2134 = vadd.f32 %v1954, %v2118
    %v2135 = vadd.f32 %v1959, %v2123
    %v2136 = vld [vmem:[%s4] sm:$0x1]
    %v2138 = vlaneseq
    %v2139 = vshrl.u32 %v2138, 7
    %v2140 = vsub.s32 0, %v2139
    %v2141 = vrot.slane %v2136, %v2140
    %v2143 = vadd.f32 %v2126, %v2141
    %v2144 = vadd.f32 %v2127, %v2141
    %v2145 = vadd.f32 %v2128, %v2141
    %v2146 = vadd.f32 %v2129, %v2141
    %v2147 = vadd.f32 %v2130, %v2141
    %v2148 = vadd.f32 %v2131, %v2141
    %v2149 = vadd.f32 %v2132, %v2141
    %v2150 = vadd.f32 %v2133, %v2141
    %v2151 = vadd.f32 %v2134, %v2141
    %v2152 = vadd.f32 %v2135, %v2141
    %v2153 = vmax.f32 %v2143, 0.0
    %v2154 = vmax.f32 %v2144, 0.0
    %v2155 = vmax.f32 %v2145, 0.0
    %v2156 = vmax.f32 %v2146, 0.0
    %v2157 = vmax.f32 %v2147, 0.0
    %v2158 = vmax.f32 %v2148, 0.0
    %v2159 = vmax.f32 %v2149, 0.0
    %v2160 = vmax.f32 %v2150, 0.0
    %v2161 = vmax.f32 %v2151, 0.0
    %v2162 = vmax.f32 %v2152, 0.0
    %2163 = vst [vmem:[#allocation9] sm:$0xff] %v2153
    %2164 = vst [vmem:[#allocation9 + $0x8] sm:$0xff] %v2154
    %2165 = vst [vmem:[#allocation9 + $0x10] sm:$0xff] %v2155
    %2166 = vst [vmem:[#allocation9 + $0x18] sm:$0xff] %v2156
    %2167 = vst [vmem:[#allocation9 + $0x20] sm:$0xff] %v2157
    %2168 = vst [vmem:[#allocation9 + $0x28] sm:$0xff] %v2158
    %2169 = vst [vmem:[#allocation9 + $0x30] sm:$0xff] %v2159
    %2170 = vst [vmem:[#allocation9 + $0x38] sm:$0xff] %v2160
    %2171 = vst [vmem:[#allocation9 + $0x40] sm:$0xff] %v2161
    %2172 = vst [vmem:[#allocation9 + $0x48] sm:$0xff] %v2162
    // Predicated region
    $region34: #{tpu_custom_call.1} parent=1 // pred_check
      _
    $region35: #{tpu_custom_call.1} parent=1 // pred_check_branch
      %2174 = sbr.rel (0) target = $region37
    $region36: #{tpu_custom_call.1} parent=1 // pred_region
      %s2176 = ssub.s32 1280, 1280
      %2177 = vsyncadd [#allocation5], %s2176
      %s2178 = sshll.u32 [#allocation9], 4
      %s2179 = int_to_ptr.vmem [resolvable:$true] %s2178
      %2184 = dma.vmem_to_hbm [thread:$0]  %s2179, 1280, %s5, [#allocation5], 128, 128, 8
    $region37: #{tpu_custom_call.1} parent=1 // pred_fallthru
      _
    // Predicated region
    $region38: #{tpu_custom_call.1} parent=1 // pred_check
      _
    $region39: #{tpu_custom_call.1} parent=1 // pred_check_branch
      %2186 = sbr.rel (0) target = $region41
    $region40: #{tpu_custom_call.1} parent=1 // pred_region
      %2187 = dma.done [#allocation5], 1280
    $region41: #{tpu_custom_call.1} parent=1 // pred_fallthru
      _
    %2188 = vsyncpa [#allocation4], 1
    %2189 = vsyncpa [#allocation7], 1
    %2190 = vsyncpa [#allocation5], 1

</llo_original>
